<compile_context>
chip_gen: v7x
topology: tpu7x:2x2x1
jax: 0.10.0
libtpu: 0.0.40
codegen_flags: <defaults>
</compile_context>

<pallas_src>
import jax
import jax.numpy as jnp
from jax.experimental import pallas as pl
from jax.experimental.pallas import tpu as pltpu

NUM_STATES = 4320
NUM_ACTIONS = 7
H1 = 50
H2 = 30
PAD = 128  # lane-padded width of the final (output) dim only


def _round_up(x, m):
    return -(-x // m) * m


def mlp_kernel(x_ref, w1_ref, w2_ref, w3_ref, b_ref, o_ref):
    # x arrives in its HBM dtype (f32); cast to bf16 in-kernel (free on VPU),
    # so there is no separate XLA convert pass over the dominant HBM stream.
    x = x_ref[...].astype(jnp.bfloat16)          # (TB, 4320)
    b = b_ref[...]                               # (3, 128) f32: rows b1, b2, b3

    # fc1 + relu  (bf16 MXU operands, f32 accumulation)
    h1 = jnp.dot(x, w1_ref[...], preferred_element_type=jnp.float32)
    h1 = jnp.maximum(h1 + b[0:1, :H1], 0.0)      # (TB, 50) f32

    # fc2 + relu  (bf16 operands -> single-pass MXU op)
    h2 = jnp.dot(h1.astype(jnp.bfloat16), w2_ref[...],
                 preferred_element_type=jnp.float32)
    h2 = jnp.maximum(h2 + b[1:2, :H2], 0.0)      # (TB, 30) f32

    # out  (output dim zero-padded to 128 lanes -> lane-dense store)
    logits = jnp.dot(h2.astype(jnp.bfloat16), w3_ref[...],
                     preferred_element_type=jnp.float32) + b[2:3, :]

    # sigmoid (pad lanes have logits == 0 -> sigmoid == 0.5, masked below)
    s = 1.0 / (1.0 + jnp.exp(-logits))

    # softmax over the first NUM_ACTIONS lanes; s is bounded in (0,1) so no
    # max-subtraction is needed; one mask zeroes the pad lanes.
    col = jax.lax.broadcasted_iota(jnp.int32, s.shape, 1)
    e = jnp.where(col < NUM_ACTIONS, jnp.exp(s), 0.0)
    denom = jnp.sum(e, axis=1, keepdims=True)
    o_ref[...] = e / denom                       # exact normalization (free)


def _choose_tb(B, tb_cap):
    """Batch tile: full-extent block for small B, else multiple-of-8 tiles with
    >= 2 grid steps (so the second v7x TensorCore gets work)."""
    tb_cap = max(8, int(tb_cap))
    if B <= min(tb_cap, 256):
        return B                                  # single full-extent block
    tb = min(tb_cap, _round_up(pl.cdiv(B, 2), 8))
    return max(8, (tb // 8) * 8)


def net_forward(x, params, *, tb=512):
    """x: (B, NUM_STATES) float32 -> (B, NUM_ACTIONS) float32 softmax probs."""
    w1, w2, w3, bias = params
    B = x.shape[0]

    TB = _choose_tb(B, tb)
    grid = (pl.cdiv(B, TB),)   # ragged last block handled by masked load/store

    flops = 2 * B * (NUM_STATES * H1 + H1 * H2 + H2 * PAD)
    bytes_accessed = (
        int(x.size) * x.dtype.itemsize
        + sum(int(p.size) * p.dtype.itemsize for p in params)
        + B * PAD * 4
    )

    out = pl.pallas_call(
        mlp_kernel,
        out_shape=jax.ShapeDtypeStruct((B, PAD), jnp.float32),
        grid_spec=pltpu.PrefetchScalarGridSpec(
            num_scalar_prefetch=0,
            grid=grid,
            in_specs=[
                pl.BlockSpec((TB, NUM_STATES), lambda i: (i, 0)),   # x: row-tiled
                pl.BlockSpec((NUM_STATES, H1), lambda i: (0, 0)),   # w1: resident
                pl.BlockSpec((H1, H2), lambda i: (0, 0)),           # w2: resident
                pl.BlockSpec((H2, PAD), lambda i: (0, 0)),          # w3: resident
                pl.BlockSpec((3, PAD), lambda i: (0, 0)),           # biases
            ],
            out_specs=pl.BlockSpec((TB, PAD), lambda i: (i, 0)),
        ),
        compiler_params=pltpu.CompilerParams(
            dimension_semantics=("parallel",),       # shard batch over v7x TCs
            vmem_limit_bytes=48 * 1024 * 1024,       # fits v7x 64 MiB physical
        ),
        cost_estimate=pl.CostEstimate(
            flops=flops,
            transcendentals=2 * B * PAD,
            bytes_accessed=bytes_accessed,
        ),
    )(x, w1, w2, w3, bias)

    return out[:, :NUM_ACTIONS]


def net_forward_ref(x, params):
    """Pure-JAX reference mirroring the kernel's bf16-operand / f32-accum dots."""
    w1, w2, w3, bias = params
    f32 = jnp.float32
    xb = x.astype(jnp.bfloat16).astype(f32)
    h1 = jnp.maximum(xb @ w1.astype(f32) + bias[0, :H1], 0.0)
    h2 = jnp.maximum(h1.astype(jnp.bfloat16).astype(f32) @ w2.astype(f32)
                     + bias[1, :H2], 0.0)
    logits = (h2.astype(jnp.bfloat16).astype(f32) @ w3.astype(f32)[:, :NUM_ACTIONS]
              + bias[2, :NUM_ACTIONS])
    s = jax.nn.sigmoid(logits)
    return jax.nn.softmax(s, axis=1)


def init_params(key):
    """Deterministic init mirroring the module: weights ~ N(0, 0.1), small biases."""
    k1, k2, k3, k4, k5, k6 = jax.random.split(key, 6)

    w1 = 0.1 * jax.random.normal(k1, (NUM_STATES, H1), jnp.float32)   # fc1.weight.T
    b1 = 0.01 * jax.random.normal(k2, (H1,), jnp.float32)
    w2 = 0.1 * jax.random.normal(k3, (H1, H2), jnp.float32)           # fc2.weight.T
    b2 = 0.01 * jax.random.normal(k4, (H2,), jnp.float32)
    w3 = 0.1 * jax.random.normal(k5, (H2, NUM_ACTIONS), jnp.float32)  # out.weight.T
    b3 = 0.01 * jax.random.normal(k6, (NUM_ACTIONS,), jnp.float32)

    # Weights stored bf16 (MXU operands; w1 is the only non-trivial HBM stream).
    w1_bf16 = w1.astype(jnp.bfloat16)
    w2_bf16 = w2.astype(jnp.bfloat16)
    # out weights: output dim zero-padded to 128 lanes (pad columns exactly 0).
    w3_p = jnp.zeros((H2, PAD), jnp.float32).at[:, :NUM_ACTIONS].set(w3)
    w3_bf16 = w3_p.astype(jnp.bfloat16)

    # All three biases in one (3, 128) f32 block -> single DMA descriptor.
    bias = jnp.zeros((3, PAD), jnp.float32)
    bias = bias.at[0, :H1].set(b1).at[1, :H2].set(b2).at[2, :NUM_ACTIONS].set(b3)

    return (w1_bf16, w2_bf16, w3_bf16, bias)


if __name__ == "__main__":
    key = jax.random.PRNGKey(0)
    kx1, kx2, kp = jax.random.split(key, 3)
    params = init_params(kp)

    # Small batch; feature dim is fixed at NUM_STATES=4320 by the module.
    B = 8
    x = jax.random.normal(kx1, (B, NUM_STATES), jnp.float32)
    out = jax.block_until_ready(net_forward(x, params))
    assert out.shape == (B, NUM_ACTIONS)
    assert bool(jnp.allclose(jnp.sum(out, axis=1), 1.0, atol=1e-3))
    ref = net_forward_ref(x, params)
    assert bool(jnp.allclose(out, ref, atol=5e-3, rtol=5e-3))

    # Exercise the multi-step grid with a ragged last block (no wrapper pad).
    B2 = 20
    x2 = jax.random.normal(kx2, (B2, NUM_STATES), jnp.float32)
    out2 = jax.block_until_ready(net_forward(x2, params, tb=16))
    assert out2.shape == (B2, NUM_ACTIONS)
    assert bool(jnp.allclose(out2, net_forward_ref(x2, params),
                             atol=5e-3, rtol=5e-3))

    print("KERNEL_OK")
</pallas_src>

<mosaic_0001>
module attributes {stable_mosaic.version = 11 : i64} {
  func.func @mlp_kernel(%arg0: i32, %arg1: memref<8x4320xf32, #tpu.memory_space<vmem>>, %arg2: memref<4320x50xbf16, #tpu.memory_space<vmem>>, %arg3: memref<50x30xbf16, #tpu.memory_space<vmem>>, %arg4: memref<30x128xbf16, #tpu.memory_space<vmem>>, %arg5: memref<3x128xf32, #tpu.memory_space<vmem>>, %arg6: memref<8x128xf32, #tpu.memory_space<vmem>>) attributes {dimension_semantics = [#tpu.dimension_semantics<parallel>], iteration_bounds = array<i64: 1>, scalar_prefetch = 0 : i64, scratch_operands = 0 : i64, tpu.core_type = #tpu.core_type<tc>, window_params = [{transform_indices = @transform_0, window_bounds = array<i64: 8, 4320>}, {pipeline_mode = #tpu.pipeline_mode<synchronous>, transform_indices = @transform_1, window_bounds = array<i64: 4320, 50>}, {pipeline_mode = #tpu.pipeline_mode<synchronous>, transform_indices = @transform_2, window_bounds = array<i64: 50, 30>}, {pipeline_mode = #tpu.pipeline_mode<synchronous>, transform_indices = @transform_3, window_bounds = array<i64: 30, 128>}, {pipeline_mode = #tpu.pipeline_mode<synchronous>, transform_indices = @transform_4, window_bounds = array<i64: 3, 128>}, {transform_indices = @transform_5, window_bounds = array<i64: 8, 128>}]} {
    %c0 = arith.constant 0 : index
    %c0_0 = arith.constant 0 : index
    %0 = vector.load %arg1[%c0, %c0_0] : memref<8x4320xf32, #tpu.memory_space<vmem>>, vector<8x4320xf32>
    %1 = arith.truncf %0 : vector<8x4320xf32> to vector<8x4320xbf16>
    %c0_1 = arith.constant 0 : index
    %c0_2 = arith.constant 0 : index
    %2 = vector.load %arg5[%c0_1, %c0_2] : memref<3x128xf32, #tpu.memory_space<vmem>>, vector<3x128xf32>
    %c0_3 = arith.constant 0 : index
    %c0_4 = arith.constant 0 : index
    %3 = vector.load %arg2[%c0_3, %c0_4] : memref<4320x50xbf16, #tpu.memory_space<vmem>>, vector<4320x50xbf16>
    %cst = arith.constant dense<0.000000e+00> : vector<8x50xf32>
    %4 = tpu.matmul %1, %3, %cst {dimension_numbers = #tpu.dot_dimension_numbers<[1], [0], [0], [1], [0, 0, 1, 1], [], []>} : vector<8x4320xbf16>, vector<4320x50xbf16>, vector<8x50xf32> -> vector<8x50xf32>
    %5 = vector.extract_strided_slice %2 {offsets = [0, 0], sizes = [1, 50], strides = [1, 1]} : vector<3x128xf32> to vector<1x50xf32>
    %6 = vector.broadcast %5 : vector<1x50xf32> to vector<8x50xf32>
    %7 = arith.addf %4, %6 : vector<8x50xf32>
    %cst_5 = arith.constant 0.000000e+00 : f32
    %8 = vector.broadcast %cst_5 : f32 to vector<8x50xf32>
    %9 = arith.maximumf %7, %8 : vector<8x50xf32>
    %10 = arith.truncf %9 : vector<8x50xf32> to vector<8x50xbf16>
    %c0_6 = arith.constant 0 : index
    %c0_7 = arith.constant 0 : index
    %11 = vector.load %arg3[%c0_6, %c0_7] : memref<50x30xbf16, #tpu.memory_space<vmem>>, vector<50x30xbf16>
    %cst_8 = arith.constant dense<0.000000e+00> : vector<8x30xf32>
    %12 = tpu.matmul %10, %11, %cst_8 {dimension_numbers = #tpu.dot_dimension_numbers<[1], [0], [0], [1], [0, 0, 1, 1], [], []>} : vector<8x50xbf16>, vector<50x30xbf16>, vector<8x30xf32> -> vector<8x30xf32>
    %13 = vector.extract_strided_slice %2 {offsets = [1, 0], sizes = [1, 30], strides = [1, 1]} : vector<3x128xf32> to vector<1x30xf32>
    %14 = vector.broadcast %13 : vector<1x30xf32> to vector<8x30xf32>
    %15 = arith.addf %12, %14 : vector<8x30xf32>
    %cst_9 = arith.constant 0.000000e+00 : f32
    %16 = vector.broadcast %cst_9 : f32 to vector<8x30xf32>
    %17 = arith.maximumf %15, %16 : vector<8x30xf32>
    %18 = arith.truncf %17 : vector<8x30xf32> to vector<8x30xbf16>
    %c0_10 = arith.constant 0 : index
    %c0_11 = arith.constant 0 : index
    %19 = vector.load %arg4[%c0_10, %c0_11] : memref<30x128xbf16, #tpu.memory_space<vmem>>, vector<30x128xbf16>
    %cst_12 = arith.constant dense<0.000000e+00> : vector<8x128xf32>
    %20 = tpu.matmul %18, %19, %cst_12 {dimension_numbers = #tpu.dot_dimension_numbers<[1], [0], [0], [1], [0, 0, 1, 1], [], []>} : vector<8x30xbf16>, vector<30x128xbf16>, vector<8x128xf32> -> vector<8x128xf32>
    %21 = vector.extract_strided_slice %2 {offsets = [2, 0], sizes = [1, 128], strides = [1, 1]} : vector<3x128xf32> to vector<1x128xf32>
    %22 = vector.broadcast %21 : vector<1x128xf32> to vector<8x128xf32>
    %23 = arith.addf %20, %22 : vector<8x128xf32>
    %cst_13 = arith.constant 0.000000e+00 : f32
    %24 = vector.broadcast %cst_13 : f32 to vector<8x128xf32>
    %25 = arith.subf %24, %23 : vector<8x128xf32>
    %26 = math.exp %25 : vector<8x128xf32>
    %cst_14 = arith.constant 1.000000e+00 : f32
    %27 = vector.broadcast %cst_14 : f32 to vector<8x128xf32>
    %28 = arith.addf %27, %26 : vector<8x128xf32>
    %cst_15 = arith.constant 1.000000e+00 : f32
    %29 = vector.broadcast %cst_15 : f32 to vector<8x128xf32>
    %30 = arith.divf %29, %28 : vector<8x128xf32>
    %31 = tpu.iota {dimensions = array<i32: 1>} : vector<8x128xi32>
    %c7_i32 = arith.constant 7 : i32
    %32 = vector.broadcast %c7_i32 : i32 to vector<8x128xi32>
    %33 = arith.cmpi slt, %31, %32 : vector<8x128xi32>
    %34 = math.exp %30 : vector<8x128xf32>
    %cst_16 = arith.constant 0.000000e+00 : f32
    %35 = vector.broadcast %cst_16 : f32 to vector<8x128xf32>
    %36 = arith.select %33, %34, %35 : vector<8x128xi1>, vector<8x128xf32>
    %cst_17 = arith.constant dense<0.000000e+00> : vector<8xf32>
    %37 = vector.multi_reduction <add>, %36, %cst_17 [1] : vector<8x128xf32> to vector<8xf32>
    %38 = vector.shape_cast %37 : vector<8xf32> to vector<8x1xf32>
    %39 = vector.broadcast %38 : vector<8x1xf32> to vector<8x128xf32>
    %40 = arith.divf %36, %39 : vector<8x128xf32>
    %c0_18 = arith.constant 0 : index
    %c0_19 = arith.constant 0 : index
    %41 = vector.load %arg6[%c0_18, %c0_19] : memref<8x128xf32, #tpu.memory_space<vmem>>, vector<8x128xf32>
    tpu.vector_store %arg6[%c0_18, %c0_19], %40 {strides = array<i32>} : memref<8x128xf32, #tpu.memory_space<vmem>>, vector<8x128xf32>,
    return
  }
  func.func @transform_0(%arg0: i32) -> (i32, i32) {
    %c0_i32 = arith.constant 0 : i32
    %c0_i32_0 = arith.constant 0 : i32
    return %arg0, %c0_i32 : i32, i32
  }
  func.func @transform_1(%arg0: i32) -> (i32, i32) {
    %c0_i32 = arith.constant 0 : i32
    %c0_i32_0 = arith.constant 0 : i32
    %c0_i32_1 = arith.constant 0 : i32
    return %c0_i32, %c0_i32_0 : i32, i32
  }
  func.func @transform_2(%arg0: i32) -> (i32, i32) {
    %c0_i32 = arith.constant 0 : i32
    %c0_i32_0 = arith.constant 0 : i32
    %c0_i32_1 = arith.constant 0 : i32
    return %c0_i32, %c0_i32_0 : i32, i32
  }
  func.func @transform_3(%arg0: i32) -> (i32, i32) {
    %c0_i32 = arith.constant 0 : i32
    %c0_i32_0 = arith.constant 0 : i32
    %c0_i32_1 = arith.constant 0 : i32
    return %c0_i32, %c0_i32_0 : i32, i32
  }
  func.func @transform_4(%arg0: i32) -> (i32, i32) {
    %c0_i32 = arith.constant 0 : i32
    %c0_i32_0 = arith.constant 0 : i32
    %c0_i32_1 = arith.constant 0 : i32
    return %c0_i32, %c0_i32_0 : i32, i32
  }
  func.func @transform_5(%arg0: i32) -> (i32, i32) {
    %c0_i32 = arith.constant 0 : i32
    %c0_i32_0 = arith.constant 0 : i32
    return %arg0, %c0_i32 : i32, i32
  }
}

</mosaic_0001>

<llo_original>
// kernel: tpu_custom_call.1
$region0: #{tpu_custom_call.1}
  #allocation0 [shape = 'u32[]', space=smem, size = 0x4, offset = 0x4, fixed_abs, tag = 'smem constant byte address 0x4 - core index']
  #allocation1 [shape = 'u32[144,128]{1,0:T(1,128)}', space=vmem, size = 0x12000, scoped, tag = 'internal scratch']
  %s0 = inlined_call_operand.vmem [shape: f32[8,4320], index: 0, kind: input, shape index: {}]
  %s1 = inlined_call_operand.vmem [shape: bf16[4320,50], index: 1, kind: input, shape index: {}]
  %s2 = inlined_call_operand.vmem [shape: bf16[50,30], index: 2, kind: input, shape index: {}]
  %s3 = inlined_call_operand.vmem [shape: bf16[30,128], index: 3, kind: input, shape index: {}]
  %s4 = inlined_call_operand.vmem [shape: f32[3,128], index: 4, kind: input, shape index: {}]
  %s5 = inlined_call_operand.hbm [shape: f32[8,128], index: 5, kind: output, shape index: {}]
  %s6 = sld [smem:[#allocation0]]
  $region30: #{tpu_custom_call.1} parent=0
    _
  %s8 = ssub.s32 1, %s6
  %s9 = scalar_select 0, %s8, %s6
  $region1: #{tpu_custom_call.1} parent=0
    #allocation2 [shape = 'u8[4096]{0}', space=vmem, size = 0x1000, scoped, tag = 'output window, operand 0, single buffered']
    #allocation3 [shape = 's32[1]{0}', space=sflag, size = 0x4, scoped, tag = 'scoped memory for tpu_custom_call.1']
    %10 = vsyncpa [#allocation3], 0
    // Predicated region
    $region2: #{tpu_custom_call.1} parent=1 // pred_check
      _
    $region3: #{tpu_custom_call.1} parent=1 // pred_check_branch
      %12 = sbr.rel (0) target = $region5
    $region4: #{tpu_custom_call.1} parent=1 // pred_region
      _
    $region5: #{tpu_custom_call.1} parent=1 // pred_fallthru
      _
    // Predicated region
    $region6: #{tpu_custom_call.1} parent=1 // pred_check
      _
    $region7: #{tpu_custom_call.1} parent=1 // pred_check_branch
      %14 = sbr.rel (0) target = $region9
    $region8: #{tpu_custom_call.1} parent=1 // pred_region
      _
    $region9: #{tpu_custom_call.1} parent=1 // pred_fallthru
      _
    // Predicated region
    $region10: #{tpu_custom_call.1} parent=1 // pred_check
      _
    $region11: #{tpu_custom_call.1} parent=1 // pred_check_branch
      %16 = sbr.rel (0) target = $region13
    $region12: #{tpu_custom_call.1} parent=1 // pred_region
      _
    $region13: #{tpu_custom_call.1} parent=1 // pred_fallthru
      _
    // Predicated region
    $region14: #{tpu_custom_call.1} parent=1 // pred_check
      _
    $region15: #{tpu_custom_call.1} parent=1 // pred_check_branch
      %18 = sbr.rel (0) target = $region17
    $region16: #{tpu_custom_call.1} parent=1 // pred_region
      _
    $region17: #{tpu_custom_call.1} parent=1 // pred_fallthru
      _
    // Predicated region
    $region18: #{tpu_custom_call.1} parent=1 // pred_check
      _
    $region19: #{tpu_custom_call.1} parent=1 // pred_check_branch
      %20 = sbr.rel (0) target = $region21
    $region20: #{tpu_custom_call.1} parent=1 // pred_region
      _
    $region21: #{tpu_custom_call.1} parent=1 // pred_fallthru
      _
    %v22 = vld [vmem:[%s0] sm:$0xff]
    %v23 = vld [vmem:[%s0 + $0x8] sm:$0xff]
    %v24 = vld [vmem:[%s0 + $0x10] sm:$0xff]
    %v25 = vld [vmem:[%s0 + $0x18] sm:$0xff]
    %v26 = vld [vmem:[%s0 + $0x20] sm:$0xff]
    %v27 = vld [vmem:[%s0 + $0x28] sm:$0xff]
    %v28 = vld [vmem:[%s0 + $0x30] sm:$0xff]
    %v29 = vld [vmem:[%s0 + $0x38] sm:$0xff]
    %v30 = vld [vmem:[%s0 + $0x40] sm:$0xff]
    %v31 = vld [vmem:[%s0 + $0x48] sm:$0xff]
    %v32 = vld [vmem:[%s0 + $0x50] sm:$0xff]
    %v33 = vld [vmem:[%s0 + $0x58] sm:$0xff]
    %v34 = vld [vmem:[%s0 + $0x60] sm:$0xff]
    %v35 = vld [vmem:[%s0 + $0x68] sm:$0xff]
    %v36 = vld [vmem:[%s0 + $0x70] sm:$0xff]
    %v37 = vld [vmem:[%s0 + $0x78] sm:$0xff]
    %v38 = vld [vmem:[%s0 + $0x80] sm:$0xff]
    %v39 = vld [vmem:[%s0 + $0x88] sm:$0xff]
    %v40 = vld [vmem:[%s0 + $0x90] sm:$0xff]
    %v41 = vld [vmem:[%s0 + $0x98] sm:$0xff]
    %v42 = vld [vmem:[%s0 + $0xa0] sm:$0xff]
    %v43 = vld [vmem:[%s0 + $0xa8] sm:$0xff]
    %v44 = vld [vmem:[%s0 + $0xb0] sm:$0xff]
    %v45 = vld [vmem:[%s0 + $0xb8] sm:$0xff]
    %v46 = vld [vmem:[%s0 + $0xc0] sm:$0xff]
    %v47 = vld [vmem:[%s0 + $0xc8] sm:$0xff]
    %v48 = vld [vmem:[%s0 + $0xd0] sm:$0xff]
    %v49 = vld [vmem:[%s0 + $0xd8] sm:$0xff]
    %v50 = vld [vmem:[%s0 + $0xe0] sm:$0xff]
    %v51 = vld [vmem:[%s0 + $0xe8] sm:$0xff]
    %v52 = vld [vmem:[%s0 + $0xf0] sm:$0xff]
    %v53 = vld [vmem:[%s0 + $0xf8] sm:$0xff]
    %v54 = vld [vmem:[%s0 + $0x100] sm:$0xff]
    %v55 = vld [vmem:[%s0 + $0x108] sm:$0xff]
    %v56 = vpack.c.bf16 %v22, %v22
    %v57 = vpack.c.bf16 %v23, %v23
    %v58 = vpack.c.bf16 %v24, %v24
    %v59 = vpack.c.bf16 %v25, %v25
    %v60 = vpack.c.bf16 %v26, %v26
    %v61 = vpack.c.bf16 %v27, %v27
    %v62 = vpack.c.bf16 %v28, %v28
    %v63 = vpack.c.bf16 %v29, %v29
    %v64 = vpack.c.bf16 %v30, %v30
    %v65 = vpack.c.bf16 %v31, %v31
    %v66 = vpack.c.bf16 %v32, %v32
    %v67 = vpack.c.bf16 %v33, %v33
    %v68 = vpack.c.bf16 %v34, %v34
    %v69 = vpack.c.bf16 %v35, %v35
    %v70 = vpack.c.bf16 %v36, %v36
    %v71 = vpack.c.bf16 %v37, %v37
    %v72 = vpack.c.bf16 %v38, %v38
    %v73 = vpack.c.bf16 %v39, %v39
    %v74 = vpack.c.bf16 %v40, %v40
    %v75 = vpack.c.bf16 %v41, %v41
    %v76 = vpack.c.bf16 %v42, %v42
    %v77 = vpack.c.bf16 %v43, %v43
    %v78 = vpack.c.bf16 %v44, %v44
    %v79 = vpack.c.bf16 %v45, %v45
    %v80 = vpack.c.bf16 %v46, %v46
    %v81 = vpack.c.bf16 %v47, %v47
    %v82 = vpack.c.bf16 %v48, %v48
    %v83 = vpack.c.bf16 %v49, %v49
    %v84 = vpack.c.bf16 %v50, %v50
    %v85 = vpack.c.bf16 %v51, %v51
    %v86 = vpack.c.bf16 %v52, %v52
    %v87 = vpack.c.bf16 %v53, %v53
    %v88 = vpack.c.bf16 %v54, %v54
    %v89 = vpack.c.bf16 %v55, %v55
    %v90 = vld [vmem:[%s4] sm:$0x7]
    %v91 = vld [vmem:[%s1] sm:$0xf]
    %v92 = vld [vmem:[%s1 + $0x4] sm:$0xf]
    %v93 = vld [vmem:[%s1 + $0x8] sm:$0xf]
    %v94 = vld [vmem:[%s1 + $0xc] sm:$0xf]
    %v95 = vld [vmem:[%s1 + $0x10] sm:$0xf]
    %v96 = vld [vmem:[%s1 + $0x14] sm:$0xf]
    %v97 = vld [vmem:[%s1 + $0x18] sm:$0xf]
    %v98 = vld [vmem:[%s1 + $0x1c] sm:$0xf]
    %v99 = vld [vmem:[%s1 + $0x20] sm:$0xf]
    %v100 = vld [vmem:[%s1 + $0x24] sm:$0xf]
    %v101 = vld [vmem:[%s1 + $0x28] sm:$0xf]
    %v102 = vld [vmem:[%s1 + $0x2c] sm:$0xf]
    %v103 = vld [vmem:[%s1 + $0x30] sm:$0xf]
    %v104 = vld [vmem:[%s1 + $0x34] sm:$0xf]
    %v105 = vld [vmem:[%s1 + $0x38] sm:$0xf]
    %v106 = vld [vmem:[%s1 + $0x3c] sm:$0xf]
    %v107 = vld [vmem:[%s1 + $0x40] sm:$0xf]
    %v108 = vld [vmem:[%s1 + $0x44] sm:$0xf]
    %v109 = vld [vmem:[%s1 + $0x48] sm:$0xf]
    %v110 = vld [vmem:[%s1 + $0x4c] sm:$0xf]
    %v111 = vld [vmem:[%s1 + $0x50] sm:$0xf]
    %v112 = vld [vmem:[%s1 + $0x54] sm:$0xf]
    %v113 = vld [vmem:[%s1 + $0x58] sm:$0xf]
    %v114 = vld [vmem:[%s1 + $0x5c] sm:$0xf]
    %v115 = vld [vmem:[%s1 + $0x60] sm:$0xf]
    %v116 = vld [vmem:[%s1 + $0x64] sm:$0xf]
    %v117 = vld [vmem:[%s1 + $0x68] sm:$0xf]
    %v118 = vld [vmem:[%s1 + $0x6c] sm:$0xf]
    %v119 = vld [vmem:[%s1 + $0x70] sm:$0xf]
    %v120 = vld [vmem:[%s1 + $0x74] sm:$0xf]
    %v121 = vld [vmem:[%s1 + $0x78] sm:$0xf]
    %v122 = vld [vmem:[%s1 + $0x7c] sm:$0xf]
    %v123 = vld [vmem:[%s1 + $0x80] sm:$0xf]
    %v124 = vld [vmem:[%s1 + $0x84] sm:$0xf]
    %v125 = vld [vmem:[%s1 + $0x88] sm:$0xf]
    %v126 = vld [vmem:[%s1 + $0x8c] sm:$0xf]
    %v127 = vld [vmem:[%s1 + $0x90] sm:$0xf]
    %v128 = vld [vmem:[%s1 + $0x94] sm:$0xf]
    %v129 = vld [vmem:[%s1 + $0x98] sm:$0xf]
    %v130 = vld [vmem:[%s1 + $0x9c] sm:$0xf]
    %v131 = vld [vmem:[%s1 + $0xa0] sm:$0xf]
    %v132 = vld [vmem:[%s1 + $0xa4] sm:$0xf]
    %v133 = vld [vmem:[%s1 + $0xa8] sm:$0xf]
    %v134 = vld [vmem:[%s1 + $0xac] sm:$0xf]
    %v135 = vld [vmem:[%s1 + $0xb0] sm:$0xf]
    %v136 = vld [vmem:[%s1 + $0xb4] sm:$0xf]
    %v137 = vld [vmem:[%s1 + $0xb8] sm:$0xf]
    %v138 = vld [vmem:[%s1 + $0xbc] sm:$0xf]
    %v139 = vld [vmem:[%s1 + $0xc0] sm:$0xf]
    %v140 = vld [vmem:[%s1 + $0xc4] sm:$0xf]
    %v141 = vld [vmem:[%s1 + $0xc8] sm:$0xf]
    %v142 = vld [vmem:[%s1 + $0xcc] sm:$0xf]
    %v143 = vld [vmem:[%s1 + $0xd0] sm:$0xf]
    %v144 = vld [vmem:[%s1 + $0xd4] sm:$0xf]
    %v145 = vld [vmem:[%s1 + $0xd8] sm:$0xf]
    %v146 = vld [vmem:[%s1 + $0xdc] sm:$0xf]
    %v147 = vld [vmem:[%s1 + $0xe0] sm:$0xf]
    %v148 = vld [vmem:[%s1 + $0xe4] sm:$0xf]
    %v149 = vld [vmem:[%s1 + $0xe8] sm:$0xf]
    %v150 = vld [vmem:[%s1 + $0xec] sm:$0xf]
    %v151 = vld [vmem:[%s1 + $0xf0] sm:$0xf]
    %v152 = vld [vmem:[%s1 + $0xf4] sm:$0xf]
    %v153 = vld [vmem:[%s1 + $0xf8] sm:$0xf]
    %v154 = vld [vmem:[%s1 + $0xfc] sm:$0xf]
    %v155 = vld [vmem:[%s1 + $0x100] sm:$0xf]
    %v156 = vld [vmem:[%s1 + $0x104] sm:$0xf]
    %v157 = vld [vmem:[%s1 + $0x108] sm:$0xf]
    %v158 = vld [vmem:[%s1 + $0x10c] sm:$0xf]
    %v159 = vld [vmem:[%s1 + $0x110] sm:$0xf]
    %v160 = vld [vmem:[%s1 + $0x114] sm:$0xf]
    %v161 = vld [vmem:[%s1 + $0x118] sm:$0xf]
    %v162 = vld [vmem:[%s1 + $0x11c] sm:$0xf]
    %v163 = vld [vmem:[%s1 + $0x120] sm:$0xf]
    %v164 = vld [vmem:[%s1 + $0x124] sm:$0xf]
    %v165 = vld [vmem:[%s1 + $0x128] sm:$0xf]
    %v166 = vld [vmem:[%s1 + $0x12c] sm:$0xf]
    %v167 = vld [vmem:[%s1 + $0x130] sm:$0xf]
    %v168 = vld [vmem:[%s1 + $0x134] sm:$0xf]
    %v169 = vld [vmem:[%s1 + $0x138] sm:$0xf]
    %v170 = vld [vmem:[%s1 + $0x13c] sm:$0xf]
    %v171 = vld [vmem:[%s1 + $0x140] sm:$0xf]
    %v172 = vld [vmem:[%s1 + $0x144] sm:$0xf]
    %v173 = vld [vmem:[%s1 + $0x148] sm:$0xf]
    %v174 = vld [vmem:[%s1 + $0x14c] sm:$0xf]
    %v175 = vld [vmem:[%s1 + $0x150] sm:$0xf]
    %v176 = vld [vmem:[%s1 + $0x154] sm:$0xf]
    %v177 = vld [vmem:[%s1 + $0x158] sm:$0xf]
    %v178 = vld [vmem:[%s1 + $0x15c] sm:$0xf]
    %v179 = vld [vmem:[%s1 + $0x160] sm:$0xf]
    %v180 = vld [vmem:[%s1 + $0x164] sm:$0xf]
    %v181 = vld [vmem:[%s1 + $0x168] sm:$0xf]
    %v182 = vld [vmem:[%s1 + $0x16c] sm:$0xf]
    %v183 = vld [vmem:[%s1 + $0x170] sm:$0xf]
    %v184 = vld [vmem:[%s1 + $0x174] sm:$0xf]
    %v185 = vld [vmem:[%s1 + $0x178] sm:$0xf]
    %v186 = vld [vmem:[%s1 + $0x17c] sm:$0xf]
    %v187 = vld [vmem:[%s1 + $0x180] sm:$0xf]
    %v188 = vld [vmem:[%s1 + $0x184] sm:$0xf]
    %v189 = vld [vmem:[%s1 + $0x188] sm:$0xf]
    %v190 = vld [vmem:[%s1 + $0x18c] sm:$0xf]
    %v191 = vld [vmem:[%s1 + $0x190] sm:$0xf]
    %v192 = vld [vmem:[%s1 + $0x194] sm:$0xf]
    %v193 = vld [vmem:[%s1 + $0x198] sm:$0xf]
    %v194 = vld [vmem:[%s1 + $0x19c] sm:$0xf]
    %v195 = vld [vmem:[%s1 + $0x1a0] sm:$0xf]
    %v196 = vld [vmem:[%s1 + $0x1a4] sm:$0xf]
    %v197 = vld [vmem:[%s1 + $0x1a8] sm:$0xf]
    %v198 = vld [vmem:[%s1 + $0x1ac] sm:$0xf]
    %v199 = vld [vmem:[%s1 + $0x1b0] sm:$0xf]
    %v200 = vld [vmem:[%s1 + $0x1b4] sm:$0xf]
    %v201 = vld [vmem:[%s1 + $0x1b8] sm:$0xf]
    %v202 = vld [vmem:[%s1 + $0x1bc] sm:$0xf]
    %v203 = vld [vmem:[%s1 + $0x1c0] sm:$0xf]
    %v204 = vld [vmem:[%s1 + $0x1c4] sm:$0xf]
    %v205 = vld [vmem:[%s1 + $0x1c8] sm:$0xf]
    %v206 = vld [vmem:[%s1 + $0x1cc] sm:$0xf]
    %v207 = vld [vmem:[%s1 + $0x1d0] sm:$0xf]
    %v208 = vld [vmem:[%s1 + $0x1d4] sm:$0xf]
    %v209 = vld [vmem:[%s1 + $0x1d8] sm:$0xf]
    %v210 = vld [vmem:[%s1 + $0x1dc] sm:$0xf]
    %v211 = vld [vmem:[%s1 + $0x1e0] sm:$0xf]
    %v212 = vld [vmem:[%s1 + $0x1e4] sm:$0xf]
    %v213 = vld [vmem:[%s1 + $0x1e8] sm:$0xf]
    %v214 = vld [vmem:[%s1 + $0x1ec] sm:$0xf]
    %v215 = vld [vmem:[%s1 + $0x1f0] sm:$0xf]
    %v216 = vld [vmem:[%s1 + $0x1f4] sm:$0xf]
    %v217 = vld [vmem:[%s1 + $0x1f8] sm:$0xf]
    %v218 = vld [vmem:[%s1 + $0x1fc] sm:$0xf]
    %v219 = vld [vmem:[%s1 + $0x200] sm:$0xf]
    %v220 = vld [vmem:[%s1 + $0x204] sm:$0xf]
    %v221 = vld [vmem:[%s1 + $0x208] sm:$0xf]
    %v222 = vld [vmem:[%s1 + $0x20c] sm:$0xf]
    %v223 = vld [vmem:[%s1 + $0x210] sm:$0xf]
    %v224 = vld [vmem:[%s1 + $0x214] sm:$0xf]
    %v225 = vld [vmem:[%s1 + $0x218] sm:$0xf]
    %v226 = vld [vmem:[%s1 + $0x21c] sm:$0xf]
    %v227 = vld [vmem:[%s1 + $0x220] sm:$0xf]
    %v228 = vld [vmem:[%s1 + $0x224] sm:$0xf]
    %v229 = vld [vmem:[%s1 + $0x228] sm:$0xf]
    %v230 = vld [vmem:[%s1 + $0x22c] sm:$0xf]
    %v231 = vld [vmem:[%s1 + $0x230] sm:$0xf]
    %v232 = vld [vmem:[%s1 + $0x234] sm:$0xf]
    %v233 = vld [vmem:[%s1 + $0x238] sm:$0xf]
    %v234 = vld [vmem:[%s1 + $0x23c] sm:$0xf]
    %v235 = vld [vmem:[%s1 + $0x240] sm:$0xf]
    %v236 = vld [vmem:[%s1 + $0x244] sm:$0xf]
    %v237 = vld [vmem:[%s1 + $0x248] sm:$0xf]
    %v238 = vld [vmem:[%s1 + $0x24c] sm:$0xf]
    %v239 = vld [vmem:[%s1 + $0x250] sm:$0xf]
    %v240 = vld [vmem:[%s1 + $0x254] sm:$0xf]
    %v241 = vld [vmem:[%s1 + $0x258] sm:$0xf]
    %v242 = vld [vmem:[%s1 + $0x25c] sm:$0xf]
    %v243 = vld [vmem:[%s1 + $0x260] sm:$0xf]
    %v244 = vld [vmem:[%s1 + $0x264] sm:$0xf]
    %v245 = vld [vmem:[%s1 + $0x268] sm:$0xf]
    %v246 = vld [vmem:[%s1 + $0x26c] sm:$0xf]
    %v247 = vld [vmem:[%s1 + $0x270] sm:$0xf]
    %v248 = vld [vmem:[%s1 + $0x274] sm:$0xf]
    %v249 = vld [vmem:[%s1 + $0x278] sm:$0xf]
    %v250 = vld [vmem:[%s1 + $0x27c] sm:$0xf]
    %v251 = vld [vmem:[%s1 + $0x280] sm:$0xf]
    %v252 = vld [vmem:[%s1 + $0x284] sm:$0xf]
    %v253 = vld [vmem:[%s1 + $0x288] sm:$0xf]
    %v254 = vld [vmem:[%s1 + $0x28c] sm:$0xf]
    %v255 = vld [vmem:[%s1 + $0x290] sm:$0xf]
    %v256 = vld [vmem:[%s1 + $0x294] sm:$0xf]
    %v257 = vld [vmem:[%s1 + $0x298] sm:$0xf]
    %v258 = vld [vmem:[%s1 + $0x29c] sm:$0xf]
    %v259 = vld [vmem:[%s1 + $0x2a0] sm:$0xf]
    %v260 = vld [vmem:[%s1 + $0x2a4] sm:$0xf]
    %v261 = vld [vmem:[%s1 + $0x2a8] sm:$0xf]
    %v262 = vld [vmem:[%s1 + $0x2ac] sm:$0xf]
    %v263 = vld [vmem:[%s1 + $0x2b0] sm:$0xf]
    %v264 = vld [vmem:[%s1 + $0x2b4] sm:$0xf]
    %v265 = vld [vmem:[%s1 + $0x2b8] sm:$0xf]
    %v266 = vld [vmem:[%s1 + $0x2bc] sm:$0xf]
    %v267 = vld [vmem:[%s1 + $0x2c0] sm:$0xf]
    %v268 = vld [vmem:[%s1 + $0x2c4] sm:$0xf]
    %v269 = vld [vmem:[%s1 + $0x2c8] sm:$0xf]
    %v270 = vld [vmem:[%s1 + $0x2cc] sm:$0xf]
    %v271 = vld [vmem:[%s1 + $0x2d0] sm:$0xf]
    %v272 = vld [vmem:[%s1 + $0x2d4] sm:$0xf]
    %v273 = vld [vmem:[%s1 + $0x2d8] sm:$0xf]
    %v274 = vld [vmem:[%s1 + $0x2dc] sm:$0xf]
    %v275 = vld [vmem:[%s1 + $0x2e0] sm:$0xf]
    %v276 = vld [vmem:[%s1 + $0x2e4] sm:$0xf]
    %v277 = vld [vmem:[%s1 + $0x2e8] sm:$0xf]
    %v278 = vld [vmem:[%s1 + $0x2ec] sm:$0xf]
    %v279 = vld [vmem:[%s1 + $0x2f0] sm:$0xf]
    %v280 = vld [vmem:[%s1 + $0x2f4] sm:$0xf]
    %v281 = vld [vmem:[%s1 + $0x2f8] sm:$0xf]
    %v282 = vld [vmem:[%s1 + $0x2fc] sm:$0xf]
    %v283 = vld [vmem:[%s1 + $0x300] sm:$0xf]
    %v284 = vld [vmem:[%s1 + $0x304] sm:$0xf]
    %v285 = vld [vmem:[%s1 + $0x308] sm:$0xf]
    %v286 = vld [vmem:[%s1 + $0x30c] sm:$0xf]
    %v287 = vld [vmem:[%s1 + $0x310] sm:$0xf]
    %v288 = vld [vmem:[%s1 + $0x314] sm:$0xf]
    %v289 = vld [vmem:[%s1 + $0x318] sm:$0xf]
    %v290 = vld [vmem:[%s1 + $0x31c] sm:$0xf]
    %v291 = vld [vmem:[%s1 + $0x320] sm:$0xf]
    %v292 = vld [vmem:[%s1 + $0x324] sm:$0xf]
    %v293 = vld [vmem:[%s1 + $0x328] sm:$0xf]
    %v294 = vld [vmem:[%s1 + $0x32c] sm:$0xf]
    %v295 = vld [vmem:[%s1 + $0x330] sm:$0xf]
    %v296 = vld [vmem:[%s1 + $0x334] sm:$0xf]
    %v297 = vld [vmem:[%s1 + $0x338] sm:$0xf]
    %v298 = vld [vmem:[%s1 + $0x33c] sm:$0xf]
    %v299 = vld [vmem:[%s1 + $0x340] sm:$0xf]
    %v300 = vld [vmem:[%s1 + $0x344] sm:$0xf]
    %v301 = vld [vmem:[%s1 + $0x348] sm:$0xf]
    %v302 = vld [vmem:[%s1 + $0x34c] sm:$0xf]
    %v303 = vld [vmem:[%s1 + $0x350] sm:$0xf]
    %v304 = vld [vmem:[%s1 + $0x354] sm:$0xf]
    %v305 = vld [vmem:[%s1 + $0x358] sm:$0xf]
    %v306 = vld [vmem:[%s1 + $0x35c] sm:$0xf]
    %v307 = vld [vmem:[%s1 + $0x360] sm:$0xf]
    %v308 = vld [vmem:[%s1 + $0x364] sm:$0xf]
    %v309 = vld [vmem:[%s1 + $0x368] sm:$0xf]
    %v310 = vld [vmem:[%s1 + $0x36c] sm:$0xf]
    %v311 = vld [vmem:[%s1 + $0x370] sm:$0xf]
    %v312 = vld [vmem:[%s1 + $0x374] sm:$0xf]
    %v313 = vld [vmem:[%s1 + $0x378] sm:$0xf]
    %v314 = vld [vmem:[%s1 + $0x37c] sm:$0xf]
    %v315 = vld [vmem:[%s1 + $0x380] sm:$0xf]
    %v316 = vld [vmem:[%s1 + $0x384] sm:$0xf]
    %v317 = vld [vmem:[%s1 + $0x388] sm:$0xf]
    %v318 = vld [vmem:[%s1 + $0x38c] sm:$0xf]
    %v319 = vld [vmem:[%s1 + $0x390] sm:$0xf]
    %v320 = vld [vmem:[%s1 + $0x394] sm:$0xf]
    %v321 = vld [vmem:[%s1 + $0x398] sm:$0xf]
    %v322 = vld [vmem:[%s1 + $0x39c] sm:$0xf]
    %v323 = vld [vmem:[%s1 + $0x3a0] sm:$0xf]
    %v324 = vld [vmem:[%s1 + $0x3a4] sm:$0xf]
    %v325 = vld [vmem:[%s1 + $0x3a8] sm:$0xf]
    %v326 = vld [vmem:[%s1 + $0x3ac] sm:$0xf]
    %v327 = vld [vmem:[%s1 + $0x3b0] sm:$0xf]
    %v328 = vld [vmem:[%s1 + $0x3b4] sm:$0xf]
    %v329 = vld [vmem:[%s1 + $0x3b8] sm:$0xf]
    %v330 = vld [vmem:[%s1 + $0x3bc] sm:$0xf]
    %v331 = vld [vmem:[%s1 + $0x3c0] sm:$0xf]
    %v332 = vld [vmem:[%s1 + $0x3c4] sm:$0xf]
    %v333 = vld [vmem:[%s1 + $0x3c8] sm:$0xf]
    %v334 = vld [vmem:[%s1 + $0x3cc] sm:$0xf]
    %v335 = vld [vmem:[%s1 + $0x3d0] sm:$0xf]
    %v336 = vld [vmem:[%s1 + $0x3d4] sm:$0xf]
    %v337 = vld [vmem:[%s1 + $0x3d8] sm:$0xf]
    %v338 = vld [vmem:[%s1 + $0x3dc] sm:$0xf]
    %v339 = vld [vmem:[%s1 + $0x3e0] sm:$0xf]
    %v340 = vld [vmem:[%s1 + $0x3e4] sm:$0xf]
    %v341 = vld [vmem:[%s1 + $0x3e8] sm:$0xf]
    %v342 = vld [vmem:[%s1 + $0x3ec] sm:$0xf]
    %v343 = vld [vmem:[%s1 + $0x3f0] sm:$0xf]
    %v344 = vld [vmem:[%s1 + $0x3f4] sm:$0xf]
    %v345 = vld [vmem:[%s1 + $0x3f8] sm:$0xf]
    %v346 = vld [vmem:[%s1 + $0x3fc] sm:$0xf]
    %v347 = vld [vmem:[%s1 + $0x400] sm:$0xf]
    %v348 = vld [vmem:[%s1 + $0x404] sm:$0xf]
    %v349 = vld [vmem:[%s1 + $0x408] sm:$0xf]
    %v350 = vld [vmem:[%s1 + $0x40c] sm:$0xf]
    %v351 = vld [vmem:[%s1 + $0x410] sm:$0xf]
    %v352 = vld [vmem:[%s1 + $0x414] sm:$0xf]
    %v353 = vld [vmem:[%s1 + $0x418] sm:$0xf]
    %v354 = vld [vmem:[%s1 + $0x41c] sm:$0xf]
    %v355 = vld [vmem:[%s1 + $0x420] sm:$0xf]
    %v356 = vld [vmem:[%s1 + $0x424] sm:$0xf]
    %v357 = vld [vmem:[%s1 + $0x428] sm:$0xf]
    %v358 = vld [vmem:[%s1 + $0x42c] sm:$0xf]
    %v359 = vld [vmem:[%s1 + $0x430] sm:$0xf]
    %v360 = vld [vmem:[%s1 + $0x434] sm:$0xf]
    %v361 = vld [vmem:[%s1 + $0x438] sm:$0xf]
    %v362 = vld [vmem:[%s1 + $0x43c] sm:$0xf]
    %v363 = vld [vmem:[%s1 + $0x440] sm:$0xf]
    %v364 = vld [vmem:[%s1 + $0x444] sm:$0xf]
    %v365 = vld [vmem:[%s1 + $0x448] sm:$0xf]
    %v366 = vld [vmem:[%s1 + $0x44c] sm:$0xf]
    %v367 = vld [vmem:[%s1 + $0x450] sm:$0xf]
    %v368 = vld [vmem:[%s1 + $0x454] sm:$0xf]
    %v369 = vld [vmem:[%s1 + $0x458] sm:$0xf]
    %v370 = vld [vmem:[%s1 + $0x45c] sm:$0xf]
    %v371 = vld [vmem:[%s1 + $0x460] sm:$0xf]
    %v372 = vld [vmem:[%s1 + $0x464] sm:$0xf]
    %v373 = vld [vmem:[%s1 + $0x468] sm:$0xf]
    %v374 = vld [vmem:[%s1 + $0x46c] sm:$0xf]
    %v375 = vld [vmem:[%s1 + $0x470] sm:$0xf]
    %v376 = vld [vmem:[%s1 + $0x474] sm:$0xf]
    %v377 = vld [vmem:[%s1 + $0x478] sm:$0xf]
    %v378 = vld [vmem:[%s1 + $0x47c] sm:$0xf]
    %v379 = vld [vmem:[%s1 + $0x480] sm:$0xf]
    %v380 = vld [vmem:[%s1 + $0x484] sm:$0xf]
    %v381 = vld [vmem:[%s1 + $0x488] sm:$0xf]
    %v382 = vld [vmem:[%s1 + $0x48c] sm:$0xf]
    %v383 = vld [vmem:[%s1 + $0x490] sm:$0xf]
    %v384 = vld [vmem:[%s1 + $0x494] sm:$0xf]
    %v385 = vld [vmem:[%s1 + $0x498] sm:$0xf]
    %v386 = vld [vmem:[%s1 + $0x49c] sm:$0xf]
    %v387 = vld [vmem:[%s1 + $0x4a0] sm:$0xf]
    %v388 = vld [vmem:[%s1 + $0x4a4] sm:$0xf]
    %v389 = vld [vmem:[%s1 + $0x4a8] sm:$0xf]
    %v390 = vld [vmem:[%s1 + $0x4ac] sm:$0xf]
    %v391 = vld [vmem:[%s1 + $0x4b0] sm:$0xf]
    %v392 = vld [vmem:[%s1 + $0x4b4] sm:$0xf]
    %v393 = vld [vmem:[%s1 + $0x4b8] sm:$0xf]
    %v394 = vld [vmem:[%s1 + $0x4bc] sm:$0xf]
    %v395 = vld [vmem:[%s1 + $0x4c0] sm:$0xf]
    %v396 = vld [vmem:[%s1 + $0x4c4] sm:$0xf]
    %v397 = vld [vmem:[%s1 + $0x4c8] sm:$0xf]
    %v398 = vld [vmem:[%s1 + $0x4cc] sm:$0xf]
    %v399 = vld [vmem:[%s1 + $0x4d0] sm:$0xf]
    %v400 = vld [vmem:[%s1 + $0x4d4] sm:$0xf]
    %v401 = vld [vmem:[%s1 + $0x4d8] sm:$0xf]
    %v402 = vld [vmem:[%s1 + $0x4dc] sm:$0xf]
    %v403 = vld [vmem:[%s1 + $0x4e0] sm:$0xf]
    %v404 = vld [vmem:[%s1 + $0x4e4] sm:$0xf]
    %v405 = vld [vmem:[%s1 + $0x4e8] sm:$0xf]
    %v406 = vld [vmem:[%s1 + $0x4ec] sm:$0xf]
    %v407 = vld [vmem:[%s1 + $0x4f0] sm:$0xf]
    %v408 = vld [vmem:[%s1 + $0x4f4] sm:$0xf]
    %v409 = vld [vmem:[%s1 + $0x4f8] sm:$0xf]
    %v410 = vld [vmem:[%s1 + $0x4fc] sm:$0xf]
    %v411 = vld [vmem:[%s1 + $0x500] sm:$0xf]
    %v412 = vld [vmem:[%s1 + $0x504] sm:$0xf]
    %v413 = vld [vmem:[%s1 + $0x508] sm:$0xf]
    %v414 = vld [vmem:[%s1 + $0x50c] sm:$0xf]
    %v415 = vld [vmem:[%s1 + $0x510] sm:$0xf]
    %v416 = vld [vmem:[%s1 + $0x514] sm:$0xf]
    %v417 = vld [vmem:[%s1 + $0x518] sm:$0xf]
    %v418 = vld [vmem:[%s1 + $0x51c] sm:$0xf]
    %v419 = vld [vmem:[%s1 + $0x520] sm:$0xf]
    %v420 = vld [vmem:[%s1 + $0x524] sm:$0xf]
    %v421 = vld [vmem:[%s1 + $0x528] sm:$0xf]
    %v422 = vld [vmem:[%s1 + $0x52c] sm:$0xf]
    %v423 = vld [vmem:[%s1 + $0x530] sm:$0xf]
    %v424 = vld [vmem:[%s1 + $0x534] sm:$0xf]
    %v425 = vld [vmem:[%s1 + $0x538] sm:$0xf]
    %v426 = vld [vmem:[%s1 + $0x53c] sm:$0xf]
    %v427 = vld [vmem:[%s1 + $0x540] sm:$0xf]
    %v428 = vld [vmem:[%s1 + $0x544] sm:$0xf]
    %v429 = vld [vmem:[%s1 + $0x548] sm:$0xf]
    %v430 = vld [vmem:[%s1 + $0x54c] sm:$0xf]
    %v431 = vld [vmem:[%s1 + $0x550] sm:$0xf]
    %v432 = vld [vmem:[%s1 + $0x554] sm:$0xf]
    %v433 = vld [vmem:[%s1 + $0x558] sm:$0xf]
    %v434 = vld [vmem:[%s1 + $0x55c] sm:$0xf]
    %v435 = vld [vmem:[%s1 + $0x560] sm:$0xf]
    %v436 = vld [vmem:[%s1 + $0x564] sm:$0xf]
    %v437 = vld [vmem:[%s1 + $0x568] sm:$0xf]
    %v438 = vld [vmem:[%s1 + $0x56c] sm:$0xf]
    %v439 = vld [vmem:[%s1 + $0x570] sm:$0xf]
    %v440 = vld [vmem:[%s1 + $0x574] sm:$0xf]
    %v441 = vld [vmem:[%s1 + $0x578] sm:$0xf]
    %v442 = vld [vmem:[%s1 + $0x57c] sm:$0xf]
    %v443 = vld [vmem:[%s1 + $0x580] sm:$0xf]
    %v444 = vld [vmem:[%s1 + $0x584] sm:$0xf]
    %v445 = vld [vmem:[%s1 + $0x588] sm:$0xf]
    %v446 = vld [vmem:[%s1 + $0x58c] sm:$0xf]
    %v447 = vld [vmem:[%s1 + $0x590] sm:$0xf]
    %v448 = vld [vmem:[%s1 + $0x594] sm:$0xf]
    %v449 = vld [vmem:[%s1 + $0x598] sm:$0xf]
    %v450 = vld [vmem:[%s1 + $0x59c] sm:$0xf]
    %v451 = vld [vmem:[%s1 + $0x5a0] sm:$0xf]
    %v452 = vld [vmem:[%s1 + $0x5a4] sm:$0xf]
    %v453 = vld [vmem:[%s1 + $0x5a8] sm:$0xf]
    %v454 = vld [vmem:[%s1 + $0x5ac] sm:$0xf]
    %v455 = vld [vmem:[%s1 + $0x5b0] sm:$0xf]
    %v456 = vld [vmem:[%s1 + $0x5b4] sm:$0xf]
    %v457 = vld [vmem:[%s1 + $0x5b8] sm:$0xf]
    %v458 = vld [vmem:[%s1 + $0x5bc] sm:$0xf]
    %v459 = vld [vmem:[%s1 + $0x5c0] sm:$0xf]
    %v460 = vld [vmem:[%s1 + $0x5c4] sm:$0xf]
    %v461 = vld [vmem:[%s1 + $0x5c8] sm:$0xf]
    %v462 = vld [vmem:[%s1 + $0x5cc] sm:$0xf]
    %v463 = vld [vmem:[%s1 + $0x5d0] sm:$0xf]
    %v464 = vld [vmem:[%s1 + $0x5d4] sm:$0xf]
    %v465 = vld [vmem:[%s1 + $0x5d8] sm:$0xf]
    %v466 = vld [vmem:[%s1 + $0x5dc] sm:$0xf]
    %v467 = vld [vmem:[%s1 + $0x5e0] sm:$0xf]
    %v468 = vld [vmem:[%s1 + $0x5e4] sm:$0xf]
    %v469 = vld [vmem:[%s1 + $0x5e8] sm:$0xf]
    %v470 = vld [vmem:[%s1 + $0x5ec] sm:$0xf]
    %v471 = vld [vmem:[%s1 + $0x5f0] sm:$0xf]
    %v472 = vld [vmem:[%s1 + $0x5f4] sm:$0xf]
    %v473 = vld [vmem:[%s1 + $0x5f8] sm:$0xf]
    %v474 = vld [vmem:[%s1 + $0x5fc] sm:$0xf]
    %v475 = vld [vmem:[%s1 + $0x600] sm:$0xf]
    %v476 = vld [vmem:[%s1 + $0x604] sm:$0xf]
    %v477 = vld [vmem:[%s1 + $0x608] sm:$0xf]
    %v478 = vld [vmem:[%s1 + $0x60c] sm:$0xf]
    %v479 = vld [vmem:[%s1 + $0x610] sm:$0xf]
    %v480 = vld [vmem:[%s1 + $0x614] sm:$0xf]
    %v481 = vld [vmem:[%s1 + $0x618] sm:$0xf]
    %v482 = vld [vmem:[%s1 + $0x61c] sm:$0xf]
    %v483 = vld [vmem:[%s1 + $0x620] sm:$0xf]
    %v484 = vld [vmem:[%s1 + $0x624] sm:$0xf]
    %v485 = vld [vmem:[%s1 + $0x628] sm:$0xf]
    %v486 = vld [vmem:[%s1 + $0x62c] sm:$0xf]
    %v487 = vld [vmem:[%s1 + $0x630] sm:$0xf]
    %v488 = vld [vmem:[%s1 + $0x634] sm:$0xf]
    %v489 = vld [vmem:[%s1 + $0x638] sm:$0xf]
    %v490 = vld [vmem:[%s1 + $0x63c] sm:$0xf]
    %v491 = vld [vmem:[%s1 + $0x640] sm:$0xf]
    %v492 = vld [vmem:[%s1 + $0x644] sm:$0xf]
    %v493 = vld [vmem:[%s1 + $0x648] sm:$0xf]
    %v494 = vld [vmem:[%s1 + $0x64c] sm:$0xf]
    %v495 = vld [vmem:[%s1 + $0x650] sm:$0xf]
    %v496 = vld [vmem:[%s1 + $0x654] sm:$0xf]
    %v497 = vld [vmem:[%s1 + $0x658] sm:$0xf]
    %v498 = vld [vmem:[%s1 + $0x65c] sm:$0xf]
    %v499 = vld [vmem:[%s1 + $0x660] sm:$0xf]
    %v500 = vld [vmem:[%s1 + $0x664] sm:$0xf]
    %v501 = vld [vmem:[%s1 + $0x668] sm:$0xf]
    %v502 = vld [vmem:[%s1 + $0x66c] sm:$0xf]
    %v503 = vld [vmem:[%s1 + $0x670] sm:$0xf]
    %v504 = vld [vmem:[%s1 + $0x674] sm:$0xf]
    %v505 = vld [vmem:[%s1 + $0x678] sm:$0xf]
    %v506 = vld [vmem:[%s1 + $0x67c] sm:$0xf]
    %v507 = vld [vmem:[%s1 + $0x680] sm:$0xf]
    %v508 = vld [vmem:[%s1 + $0x684] sm:$0xf]
    %v509 = vld [vmem:[%s1 + $0x688] sm:$0xf]
    %v510 = vld [vmem:[%s1 + $0x68c] sm:$0xf]
    %v511 = vld [vmem:[%s1 + $0x690] sm:$0xf]
    %v512 = vld [vmem:[%s1 + $0x694] sm:$0xf]
    %v513 = vld [vmem:[%s1 + $0x698] sm:$0xf]
    %v514 = vld [vmem:[%s1 + $0x69c] sm:$0xf]
    %v515 = vld [vmem:[%s1 + $0x6a0] sm:$0xf]
    %v516 = vld [vmem:[%s1 + $0x6a4] sm:$0xf]
    %v517 = vld [vmem:[%s1 + $0x6a8] sm:$0xf]
    %v518 = vld [vmem:[%s1 + $0x6ac] sm:$0xf]
    %v519 = vld [vmem:[%s1 + $0x6b0] sm:$0xf]
    %v520 = vld [vmem:[%s1 + $0x6b4] sm:$0xf]
    %v521 = vld [vmem:[%s1 + $0x6b8] sm:$0xf]
    %v522 = vld [vmem:[%s1 + $0x6bc] sm:$0xf]
    %v523 = vld [vmem:[%s1 + $0x6c0] sm:$0xf]
    %v524 = vld [vmem:[%s1 + $0x6c4] sm:$0xf]
    %v525 = vld [vmem:[%s1 + $0x6c8] sm:$0xf]
    %v526 = vld [vmem:[%s1 + $0x6cc] sm:$0xf]
    %v527 = vld [vmem:[%s1 + $0x6d0] sm:$0xf]
    %v528 = vld [vmem:[%s1 + $0x6d4] sm:$0xf]
    %v529 = vld [vmem:[%s1 + $0x6d8] sm:$0xf]
    %v530 = vld [vmem:[%s1 + $0x6dc] sm:$0xf]
    %v531 = vld [vmem:[%s1 + $0x6e0] sm:$0xf]
    %v532 = vld [vmem:[%s1 + $0x6e4] sm:$0xf]
    %v533 = vld [vmem:[%s1 + $0x6e8] sm:$0xf]
    %v534 = vld [vmem:[%s1 + $0x6ec] sm:$0xf]
    %v535 = vld [vmem:[%s1 + $0x6f0] sm:$0xf]
    %v536 = vld [vmem:[%s1 + $0x6f4] sm:$0xf]
    %v537 = vld [vmem:[%s1 + $0x6f8] sm:$0xf]
    %v538 = vld [vmem:[%s1 + $0x6fc] sm:$0xf]
    %v539 = vld [vmem:[%s1 + $0x700] sm:$0xf]
    %v540 = vld [vmem:[%s1 + $0x704] sm:$0xf]
    %v541 = vld [vmem:[%s1 + $0x708] sm:$0xf]
    %v542 = vld [vmem:[%s1 + $0x70c] sm:$0xf]
    %v543 = vld [vmem:[%s1 + $0x710] sm:$0xf]
    %v544 = vld [vmem:[%s1 + $0x714] sm:$0xf]
    %v545 = vld [vmem:[%s1 + $0x718] sm:$0xf]
    %v546 = vld [vmem:[%s1 + $0x71c] sm:$0xf]
    %v547 = vld [vmem:[%s1 + $0x720] sm:$0xf]
    %v548 = vld [vmem:[%s1 + $0x724] sm:$0xf]
    %v549 = vld [vmem:[%s1 + $0x728] sm:$0xf]
    %v550 = vld [vmem:[%s1 + $0x72c] sm:$0xf]
    %v551 = vld [vmem:[%s1 + $0x730] sm:$0xf]
    %v552 = vld [vmem:[%s1 + $0x734] sm:$0xf]
    %v553 = vld [vmem:[%s1 + $0x738] sm:$0xf]
    %v554 = vld [vmem:[%s1 + $0x73c] sm:$0xf]
    %v555 = vld [vmem:[%s1 + $0x740] sm:$0xf]
    %v556 = vld [vmem:[%s1 + $0x744] sm:$0xf]
    %v557 = vld [vmem:[%s1 + $0x748] sm:$0xf]
    %v558 = vld [vmem:[%s1 + $0x74c] sm:$0xf]
    %v559 = vld [vmem:[%s1 + $0x750] sm:$0xf]
    %v560 = vld [vmem:[%s1 + $0x754] sm:$0xf]
    %v561 = vld [vmem:[%s1 + $0x758] sm:$0xf]
    %v562 = vld [vmem:[%s1 + $0x75c] sm:$0xf]
    %v563 = vld [vmem:[%s1 + $0x760] sm:$0xf]
    %v564 = vld [vmem:[%s1 + $0x764] sm:$0xf]
    %v565 = vld [vmem:[%s1 + $0x768] sm:$0xf]
    %v566 = vld [vmem:[%s1 + $0x76c] sm:$0xf]
    %v567 = vld [vmem:[%s1 + $0x770] sm:$0xf]
    %v568 = vld [vmem:[%s1 + $0x774] sm:$0xf]
    %v569 = vld [vmem:[%s1 + $0x778] sm:$0xf]
    %v570 = vld [vmem:[%s1 + $0x77c] sm:$0xf]
    %v571 = vld [vmem:[%s1 + $0x780] sm:$0xf]
    %v572 = vld [vmem:[%s1 + $0x784] sm:$0xf]
    %v573 = vld [vmem:[%s1 + $0x788] sm:$0xf]
    %v574 = vld [vmem:[%s1 + $0x78c] sm:$0xf]
    %v575 = vld [vmem:[%s1 + $0x790] sm:$0xf]
    %v576 = vld [vmem:[%s1 + $0x794] sm:$0xf]
    %v577 = vld [vmem:[%s1 + $0x798] sm:$0xf]
    %v578 = vld [vmem:[%s1 + $0x79c] sm:$0xf]
    %v579 = vld [vmem:[%s1 + $0x7a0] sm:$0xf]
    %v580 = vld [vmem:[%s1 + $0x7a4] sm:$0xf]
    %v581 = vld [vmem:[%s1 + $0x7a8] sm:$0xf]
    %v582 = vld [vmem:[%s1 + $0x7ac] sm:$0xf]
    %v583 = vld [vmem:[%s1 + $0x7b0] sm:$0xf]
    %v584 = vld [vmem:[%s1 + $0x7b4] sm:$0xf]
    %v585 = vld [vmem:[%s1 + $0x7b8] sm:$0xf]
    %v586 = vld [vmem:[%s1 + $0x7bc] sm:$0xf]
    %v587 = vld [vmem:[%s1 + $0x7c0] sm:$0xf]
    %v588 = vld [vmem:[%s1 + $0x7c4] sm:$0xf]
    %v589 = vld [vmem:[%s1 + $0x7c8] sm:$0xf]
    %v590 = vld [vmem:[%s1 + $0x7cc] sm:$0xf]
    %v591 = vld [vmem:[%s1 + $0x7d0] sm:$0xf]
    %v592 = vld [vmem:[%s1 + $0x7d4] sm:$0xf]
    %v593 = vld [vmem:[%s1 + $0x7d8] sm:$0xf]
    %v594 = vld [vmem:[%s1 + $0x7dc] sm:$0xf]
    %v595 = vld [vmem:[%s1 + $0x7e0] sm:$0xf]
    %v596 = vld [vmem:[%s1 + $0x7e4] sm:$0xf]
    %v597 = vld [vmem:[%s1 + $0x7e8] sm:$0xf]
    %v598 = vld [vmem:[%s1 + $0x7ec] sm:$0xf]
    %v599 = vld [vmem:[%s1 + $0x7f0] sm:$0xf]
    %v600 = vld [vmem:[%s1 + $0x7f4] sm:$0xf]
    %v601 = vld [vmem:[%s1 + $0x7f8] sm:$0xf]
    %v602 = vld [vmem:[%s1 + $0x7fc] sm:$0xf]
    %v603 = vld [vmem:[%s1 + $0x800] sm:$0xf]
    %v604 = vld [vmem:[%s1 + $0x804] sm:$0xf]
    %v605 = vld [vmem:[%s1 + $0x808] sm:$0xf]
    %v606 = vld [vmem:[%s1 + $0x80c] sm:$0xf]
    %v607 = vld [vmem:[%s1 + $0x810] sm:$0xf]
    %v608 = vld [vmem:[%s1 + $0x814] sm:$0xf]
    %v609 = vld [vmem:[%s1 + $0x818] sm:$0xf]
    %v610 = vld [vmem:[%s1 + $0x81c] sm:$0xf]
    %v611 = vld [vmem:[%s1 + $0x820] sm:$0xf]
    %v612 = vld [vmem:[%s1 + $0x824] sm:$0xf]
    %v613 = vld [vmem:[%s1 + $0x828] sm:$0xf]
    %v614 = vld [vmem:[%s1 + $0x82c] sm:$0xf]
    %v615 = vld [vmem:[%s1 + $0x830] sm:$0xf]
    %v616 = vld [vmem:[%s1 + $0x834] sm:$0xf]
    %v617 = vld [vmem:[%s1 + $0x838] sm:$0xf]
    %v618 = vld [vmem:[%s1 + $0x83c] sm:$0xf]
    %v619 = vld [vmem:[%s1 + $0x840] sm:$0xf]
    %v620 = vld [vmem:[%s1 + $0x844] sm:$0xf]
    %v621 = vld [vmem:[%s1 + $0x848] sm:$0xf]
    %v622 = vld [vmem:[%s1 + $0x84c] sm:$0xf]
    %v623 = vld [vmem:[%s1 + $0x850] sm:$0xf]
    %v624 = vld [vmem:[%s1 + $0x854] sm:$0xf]
    %v625 = vld [vmem:[%s1 + $0x858] sm:$0xf]
    %v626 = vld [vmem:[%s1 + $0x85c] sm:$0xf]
    %v627 = vld [vmem:[%s1 + $0x860] sm:$0xf]
    %v628 = vld [vmem:[%s1 + $0x864] sm:$0xf]
    %v629 = vld [vmem:[%s1 + $0x868] sm:$0xf]
    %v630 = vld [vmem:[%s1 + $0x86c] sm:$0xf]
    %v631 = vlaneseq
    %v632 = vshrl.u32 %v631, 7
    %v633 = vsub.s32 0, %v632
    %v634 = vrot.slane %v90, %v633
    %v1175 = vunpack.c.l.b16 %v91
    %v1176 = vunpack.c.l.b16 %v92
    %v1177 = vunpack.c.l.b16 %v93
    %v1178 = vunpack.c.l.b16 %v94
    %v1179 = vunpack.c.l.b16 %v95
    %v1180 = vunpack.c.l.b16 %v96
    %v1181 = vunpack.c.l.b16 %v97
    %v1182 = vunpack.c.l.b16 %v98
    %v1183 = vunpack.c.l.b16 %v99
    %v1184 = vunpack.c.l.b16 %v100
    %v1185 = vunpack.c.l.b16 %v101
    %v1186 = vunpack.c.l.b16 %v102
    %v1187 = vunpack.c.l.b16 %v103
    %v1188 = vunpack.c.l.b16 %v104
    %v1189 = vunpack.c.l.b16 %v105
    %v1190 = vunpack.c.l.b16 %v106
    %v1191 = vunpack.c.l.b16 %v107
    %v1192 = vunpack.c.l.b16 %v108
    %v1193 = vunpack.c.l.b16 %v109
    %v1194 = vunpack.c.l.b16 %v110
    %v1195 = vunpack.c.l.b16 %v111
    %v1196 = vunpack.c.l.b16 %v112
    %v1197 = vunpack.c.l.b16 %v113
    %v1198 = vunpack.c.l.b16 %v114
    %v1199 = vunpack.c.l.b16 %v115
    %v1200 = vunpack.c.l.b16 %v116
    %v1201 = vunpack.c.l.b16 %v117
    %v1202 = vunpack.c.l.b16 %v118
    %v1203 = vunpack.c.l.b16 %v119
    %v1204 = vunpack.c.l.b16 %v120
    %v1205 = vunpack.c.l.b16 %v121
    %v1206 = vunpack.c.l.b16 %v122
    %v1207 = vunpack.c.l.b16 %v123
    %v1208 = vunpack.c.l.b16 %v124
    %v1209 = vunpack.c.l.b16 %v125
    %v1210 = vunpack.c.l.b16 %v126
    %v1211 = vunpack.c.l.b16 %v127
    %v1212 = vunpack.c.l.b16 %v128
    %v1213 = vunpack.c.l.b16 %v129
    %v1214 = vunpack.c.l.b16 %v130
    %v1215 = vunpack.c.l.b16 %v131
    %v1216 = vunpack.c.l.b16 %v132
    %v1217 = vunpack.c.l.b16 %v133
    %v1218 = vunpack.c.l.b16 %v134
    %v1219 = vunpack.c.l.b16 %v135
    %v1220 = vunpack.c.l.b16 %v136
    %v1221 = vunpack.c.l.b16 %v137
    %v1222 = vunpack.c.l.b16 %v138
    %v1223 = vunpack.c.l.b16 %v139
    %v1224 = vunpack.c.l.b16 %v140
    %v1225 = vunpack.c.l.b16 %v141
    %v1226 = vunpack.c.l.b16 %v142
    %v1227 = vunpack.c.l.b16 %v143
    %v1228 = vunpack.c.l.b16 %v144
    %v1229 = vunpack.c.l.b16 %v145
    %v1230 = vunpack.c.l.b16 %v146
    %v1231 = vunpack.c.l.b16 %v147
    %v1232 = vunpack.c.l.b16 %v148
    %v1233 = vunpack.c.l.b16 %v149
    %v1234 = vunpack.c.l.b16 %v150
    %v1235 = vunpack.c.l.b16 %v151
    %v1236 = vunpack.c.l.b16 %v152
    %v1237 = vunpack.c.l.b16 %v153
    %v1238 = vunpack.c.l.b16 %v154
    %v1239 = vunpack.c.l.b16 %v155
    %v1240 = vunpack.c.l.b16 %v156
    %v1241 = vunpack.c.l.b16 %v157
    %v1242 = vunpack.c.l.b16 %v158
    %v1243 = vunpack.c.l.b16 %v159
    %v1244 = vunpack.c.l.b16 %v160
    %v1245 = vunpack.c.l.b16 %v161
    %v1246 = vunpack.c.l.b16 %v162
    %v1247 = vunpack.c.l.b16 %v163
    %v1248 = vunpack.c.l.b16 %v164
    %v1249 = vunpack.c.l.b16 %v165
    %v1250 = vunpack.c.l.b16 %v166
    %v1251 = vunpack.c.l.b16 %v167
    %v1252 = vunpack.c.l.b16 %v168
    %v1253 = vunpack.c.l.b16 %v169
    %v1254 = vunpack.c.l.b16 %v170
    %v1255 = vunpack.c.l.b16 %v171
    %v1256 = vunpack.c.l.b16 %v172
    %v1257 = vunpack.c.l.b16 %v173
    %v1258 = vunpack.c.l.b16 %v174
    %v1259 = vunpack.c.l.b16 %v175
    %v1260 = vunpack.c.l.b16 %v176
    %v1261 = vunpack.c.l.b16 %v177
    %v1262 = vunpack.c.l.b16 %v178
    %v1263 = vunpack.c.l.b16 %v179
    %v1264 = vunpack.c.l.b16 %v180
    %v1265 = vunpack.c.l.b16 %v181
    %v1266 = vunpack.c.l.b16 %v182
    %v1267 = vunpack.c.l.b16 %v183
    %v1268 = vunpack.c.l.b16 %v184
    %v1269 = vunpack.c.l.b16 %v185
    %v1270 = vunpack.c.l.b16 %v186
    %v1271 = vunpack.c.l.b16 %v187
    %v1272 = vunpack.c.l.b16 %v188
    %v1273 = vunpack.c.l.b16 %v189
    %v1274 = vunpack.c.l.b16 %v190
    %v1275 = vunpack.c.l.b16 %v191
    %v1276 = vunpack.c.l.b16 %v192
    %v1277 = vunpack.c.l.b16 %v193
    %v1278 = vunpack.c.l.b16 %v194
    %v1279 = vunpack.c.l.b16 %v195
    %v1280 = vunpack.c.l.b16 %v196
    %v1281 = vunpack.c.l.b16 %v197
    %v1282 = vunpack.c.l.b16 %v198
    %v1283 = vunpack.c.l.b16 %v199
    %v1284 = vunpack.c.l.b16 %v200
    %v1285 = vunpack.c.l.b16 %v201
    %v1286 = vunpack.c.l.b16 %v202
    %v1287 = vunpack.c.l.b16 %v203
    %v1288 = vunpack.c.l.b16 %v204
    %v1289 = vunpack.c.l.b16 %v205
    %v1290 = vunpack.c.l.b16 %v206
    %v1291 = vunpack.c.l.b16 %v207
    %v1292 = vunpack.c.l.b16 %v208
    %v1293 = vunpack.c.l.b16 %v209
    %v1294 = vunpack.c.l.b16 %v210
    %v1295 = vunpack.c.l.b16 %v211
    %v1296 = vunpack.c.l.b16 %v212
    %v1297 = vunpack.c.l.b16 %v213
    %v1298 = vunpack.c.l.b16 %v214
    %v1299 = vunpack.c.l.b16 %v215
    %v1300 = vunpack.c.l.b16 %v216
    %v1301 = vunpack.c.l.b16 %v217
    %v1302 = vunpack.c.l.b16 %v218
    %v1303 = vunpack.c.l.b16 %v219
    %v1304 = vunpack.c.l.b16 %v220
    %v1305 = vunpack.c.l.b16 %v221
    %v1306 = vunpack.c.l.b16 %v222
    %v1307 = vunpack.c.l.b16 %v223
    %v1308 = vunpack.c.l.b16 %v224
    %v1309 = vunpack.c.l.b16 %v225
    %v1310 = vunpack.c.l.b16 %v226
    %v1311 = vunpack.c.l.b16 %v227
    %v1312 = vunpack.c.l.b16 %v228
    %v1313 = vunpack.c.l.b16 %v229
    %v1314 = vunpack.c.l.b16 %v230
    %v1315 = vunpack.c.l.b16 %v231
    %v1316 = vunpack.c.l.b16 %v232
    %v1317 = vunpack.c.l.b16 %v233
    %v1318 = vunpack.c.l.b16 %v234
    %v1319 = vunpack.c.l.b16 %v235
    %v1320 = vunpack.c.l.b16 %v236
    %v1321 = vunpack.c.l.b16 %v237
    %v1322 = vunpack.c.l.b16 %v238
    %v1323 = vunpack.c.l.b16 %v239
    %v1324 = vunpack.c.l.b16 %v240
    %v1325 = vunpack.c.l.b16 %v241
    %v1326 = vunpack.c.l.b16 %v242
    %v1327 = vunpack.c.l.b16 %v243
    %v1328 = vunpack.c.l.b16 %v244
    %v1329 = vunpack.c.l.b16 %v245
    %v1330 = vunpack.c.l.b16 %v246
    %v1331 = vunpack.c.l.b16 %v247
    %v1332 = vunpack.c.l.b16 %v248
    %v1333 = vunpack.c.l.b16 %v249
    %v1334 = vunpack.c.l.b16 %v250
    %v1335 = vunpack.c.l.b16 %v251
    %v1336 = vunpack.c.l.b16 %v252
    %v1337 = vunpack.c.l.b16 %v253
    %v1338 = vunpack.c.l.b16 %v254
    %v1339 = vunpack.c.l.b16 %v255
    %v1340 = vunpack.c.l.b16 %v256
    %v1341 = vunpack.c.l.b16 %v257
    %v1342 = vunpack.c.l.b16 %v258
    %v1343 = vunpack.c.l.b16 %v259
    %v1344 = vunpack.c.l.b16 %v260
    %v1345 = vunpack.c.l.b16 %v261
    %v1346 = vunpack.c.l.b16 %v262
    %v1347 = vunpack.c.l.b16 %v263
    %v1348 = vunpack.c.l.b16 %v264
    %v1349 = vunpack.c.l.b16 %v265
    %v1350 = vunpack.c.l.b16 %v266
    %v1351 = vunpack.c.l.b16 %v267
    %v1352 = vunpack.c.l.b16 %v268
    %v1353 = vunpack.c.l.b16 %v269
    %v1354 = vunpack.c.l.b16 %v270
    %v1355 = vunpack.c.l.b16 %v271
    %v1356 = vunpack.c.l.b16 %v272
    %v1357 = vunpack.c.l.b16 %v273
    %v1358 = vunpack.c.l.b16 %v274
    %v1359 = vunpack.c.l.b16 %v275
    %v1360 = vunpack.c.l.b16 %v276
    %v1361 = vunpack.c.l.b16 %v277
    %v1362 = vunpack.c.l.b16 %v278
    %v1363 = vunpack.c.l.b16 %v279
    %v1364 = vunpack.c.l.b16 %v280
    %v1365 = vunpack.c.l.b16 %v281
    %v1366 = vunpack.c.l.b16 %v282
    %v1367 = vunpack.c.l.b16 %v283
    %v1368 = vunpack.c.l.b16 %v284
    %v1369 = vunpack.c.l.b16 %v285
    %v1370 = vunpack.c.l.b16 %v286
    %v1371 = vunpack.c.l.b16 %v287
    %v1372 = vunpack.c.l.b16 %v288
    %v1373 = vunpack.c.l.b16 %v289
    %v1374 = vunpack.c.l.b16 %v290
    %v1375 = vunpack.c.l.b16 %v291
    %v1376 = vunpack.c.l.b16 %v292
    %v1377 = vunpack.c.l.b16 %v293
    %v1378 = vunpack.c.l.b16 %v294
    %v1379 = vunpack.c.l.b16 %v295
    %v1380 = vunpack.c.l.b16 %v296
    %v1381 = vunpack.c.l.b16 %v297
    %v1382 = vunpack.c.l.b16 %v298
    %v1383 = vunpack.c.l.b16 %v299
    %v1384 = vunpack.c.l.b16 %v300
    %v1385 = vunpack.c.l.b16 %v301
    %v1386 = vunpack.c.l.b16 %v302
    %v1387 = vunpack.c.l.b16 %v303
    %v1388 = vunpack.c.l.b16 %v304
    %v1389 = vunpack.c.l.b16 %v305
    %v1390 = vunpack.c.l.b16 %v306
    %v1391 = vunpack.c.l.b16 %v307
    %v1392 = vunpack.c.l.b16 %v308
    %v1393 = vunpack.c.l.b16 %v309
    %v1394 = vunpack.c.l.b16 %v310
    %v1395 = vunpack.c.l.b16 %v311
    %v1396 = vunpack.c.l.b16 %v312
    %v1397 = vunpack.c.l.b16 %v313
    %v1398 = vunpack.c.l.b16 %v314
    %v1399 = vunpack.c.l.b16 %v315
    %v1400 = vunpack.c.l.b16 %v316
    %v1401 = vunpack.c.l.b16 %v317
    %v1402 = vunpack.c.l.b16 %v318
    %v1403 = vunpack.c.l.b16 %v319
    %v1404 = vunpack.c.l.b16 %v320
    %v1405 = vunpack.c.l.b16 %v321
    %v1406 = vunpack.c.l.b16 %v322
    %v1407 = vunpack.c.l.b16 %v323
    %v1408 = vunpack.c.l.b16 %v324
    %v1409 = vunpack.c.l.b16 %v325
    %v1410 = vunpack.c.l.b16 %v326
    %v1411 = vunpack.c.l.b16 %v327
    %v1412 = vunpack.c.l.b16 %v328
    %v1413 = vunpack.c.l.b16 %v329
    %v1414 = vunpack.c.l.b16 %v330
    %v1415 = vunpack.c.l.b16 %v331
    %v1416 = vunpack.c.l.b16 %v332
    %v1417 = vunpack.c.l.b16 %v333
    %v1418 = vunpack.c.l.b16 %v334
    %v1419 = vunpack.c.l.b16 %v335
    %v1420 = vunpack.c.l.b16 %v336
    %v1421 = vunpack.c.l.b16 %v337
    %v1422 = vunpack.c.l.b16 %v338
    %v1423 = vunpack.c.l.b16 %v339
    %v1424 = vunpack.c.l.b16 %v340
    %v1425 = vunpack.c.l.b16 %v341
    %v1426 = vunpack.c.l.b16 %v342
    %v1427 = vunpack.c.l.b16 %v343
    %v1428 = vunpack.c.l.b16 %v344
    %v1429 = vunpack.c.l.b16 %v345
    %v1430 = vunpack.c.l.b16 %v346
    %v1431 = vunpack.c.l.b16 %v347
    %v1432 = vunpack.c.l.b16 %v348
    %v1433 = vunpack.c.l.b16 %v349
    %v1434 = vunpack.c.l.b16 %v350
    %v1435 = vunpack.c.l.b16 %v351
    %v1436 = vunpack.c.l.b16 %v352
    %v1437 = vunpack.c.l.b16 %v353
    %v1438 = vunpack.c.l.b16 %v354
    %v1439 = vunpack.c.l.b16 %v355
    %v1440 = vunpack.c.l.b16 %v356
    %v1441 = vunpack.c.l.b16 %v357
    %v1442 = vunpack.c.l.b16 %v358
    %v1443 = vunpack.c.l.b16 %v359
    %v1444 = vunpack.c.l.b16 %v360
    %v1445 = vunpack.c.l.b16 %v361
    %v1446 = vunpack.c.l.b16 %v362
    %v1447 = vunpack.c.l.b16 %v363
    %v1448 = vunpack.c.l.b16 %v364
    %v1449 = vunpack.c.l.b16 %v365
    %v1450 = vunpack.c.l.b16 %v366
    %v1451 = vunpack.c.l.b16 %v367
    %v1452 = vunpack.c.l.b16 %v368
    %v1453 = vunpack.c.l.b16 %v369
    %v1454 = vunpack.c.l.b16 %v370
    %v1455 = vunpack.c.l.b16 %v371
    %v1456 = vunpack.c.l.b16 %v372
    %v1457 = vunpack.c.l.b16 %v373
    %v1458 = vunpack.c.l.b16 %v374
    %v1459 = vunpack.c.l.b16 %v375
    %v1460 = vunpack.c.l.b16 %v376
    %v1461 = vunpack.c.l.b16 %v377
    %v1462 = vunpack.c.l.b16 %v378
    %v1463 = vunpack.c.l.b16 %v379
    %v1464 = vunpack.c.l.b16 %v380
    %v1465 = vunpack.c.l.b16 %v381
    %v1466 = vunpack.c.l.b16 %v382
    %v1467 = vunpack.c.l.b16 %v383
    %v1468 = vunpack.c.l.b16 %v384
    %v1469 = vunpack.c.l.b16 %v385
    %v1470 = vunpack.c.l.b16 %v386
    %v1471 = vunpack.c.l.b16 %v387
    %v1472 = vunpack.c.l.b16 %v388
    %v1473 = vunpack.c.l.b16 %v389
    %v1474 = vunpack.c.l.b16 %v390
    %v1475 = vunpack.c.l.b16 %v391
    %v1476 = vunpack.c.l.b16 %v392
    %v1477 = vunpack.c.l.b16 %v393
    %v1478 = vunpack.c.l.b16 %v394
    %v1479 = vunpack.c.l.b16 %v395
    %v1480 = vunpack.c.l.b16 %v396
    %v1481 = vunpack.c.l.b16 %v397
    %v1482 = vunpack.c.l.b16 %v398
    %v1483 = vunpack.c.l.b16 %v399
    %v1484 = vunpack.c.l.b16 %v400
    %v1485 = vunpack.c.l.b16 %v401
    %v1486 = vunpack.c.l.b16 %v402
    %v1487 = vunpack.c.l.b16 %v403
    %v1488 = vunpack.c.l.b16 %v404
    %v1489 = vunpack.c.l.b16 %v405
    %v1490 = vunpack.c.l.b16 %v406
    %v1491 = vunpack.c.l.b16 %v407
    %v1492 = vunpack.c.l.b16 %v408
    %v1493 = vunpack.c.l.b16 %v409
    %v1494 = vunpack.c.l.b16 %v410
    %v1495 = vunpack.c.l.b16 %v411
    %v1496 = vunpack.c.l.b16 %v412
    %v1497 = vunpack.c.l.b16 %v413
    %v1498 = vunpack.c.l.b16 %v414
    %v1499 = vunpack.c.l.b16 %v415
    %v1500 = vunpack.c.l.b16 %v416
    %v1501 = vunpack.c.l.b16 %v417
    %v1502 = vunpack.c.l.b16 %v418
    %v1503 = vunpack.c.l.b16 %v419
    %v1504 = vunpack.c.l.b16 %v420
    %v1505 = vunpack.c.l.b16 %v421
    %v1506 = vunpack.c.l.b16 %v422
    %v1507 = vunpack.c.l.b16 %v423
    %v1508 = vunpack.c.l.b16 %v424
    %v1509 = vunpack.c.l.b16 %v425
    %v1510 = vunpack.c.l.b16 %v426
    %v1511 = vunpack.c.l.b16 %v427
    %v1512 = vunpack.c.l.b16 %v428
    %v1513 = vunpack.c.l.b16 %v429
    %v1514 = vunpack.c.l.b16 %v430
    %v1515 = vunpack.c.l.b16 %v431
    %v1516 = vunpack.c.l.b16 %v432
    %v1517 = vunpack.c.l.b16 %v433
    %v1518 = vunpack.c.l.b16 %v434
    %v1519 = vunpack.c.l.b16 %v435
    %v1520 = vunpack.c.l.b16 %v436
    %v1521 = vunpack.c.l.b16 %v437
    %v1522 = vunpack.c.l.b16 %v438
    %v1523 = vunpack.c.l.b16 %v439
    %v1524 = vunpack.c.l.b16 %v440
    %v1525 = vunpack.c.l.b16 %v441
    %v1526 = vunpack.c.l.b16 %v442
    %v1527 = vunpack.c.l.b16 %v443
    %v1528 = vunpack.c.l.b16 %v444
    %v1529 = vunpack.c.l.b16 %v445
    %v1530 = vunpack.c.l.b16 %v446
    %v1531 = vunpack.c.l.b16 %v447
    %v1532 = vunpack.c.l.b16 %v448
    %v1533 = vunpack.c.l.b16 %v449
    %v1534 = vunpack.c.l.b16 %v450
    %v1535 = vunpack.c.l.b16 %v451
    %v1536 = vunpack.c.l.b16 %v452
    %v1537 = vunpack.c.l.b16 %v453
    %v1538 = vunpack.c.l.b16 %v454
    %v1539 = vunpack.c.l.b16 %v455
    %v1540 = vunpack.c.l.b16 %v456
    %v1541 = vunpack.c.l.b16 %v457
    %v1542 = vunpack.c.l.b16 %v458
    %v1543 = vunpack.c.l.b16 %v459
    %v1544 = vunpack.c.l.b16 %v460
    %v1545 = vunpack.c.l.b16 %v461
    %v1546 = vunpack.c.l.b16 %v462
    %v1547 = vunpack.c.l.b16 %v463
    %v1548 = vunpack.c.l.b16 %v464
    %v1549 = vunpack.c.l.b16 %v465
    %v1550 = vunpack.c.l.b16 %v466
    %v1551 = vunpack.c.l.b16 %v467
    %v1552 = vunpack.c.l.b16 %v468
    %v1553 = vunpack.c.l.b16 %v469
    %v1554 = vunpack.c.l.b16 %v470
    %v1555 = vunpack.c.l.b16 %v471
    %v1556 = vunpack.c.l.b16 %v472
    %v1557 = vunpack.c.l.b16 %v473
    %v1558 = vunpack.c.l.b16 %v474
    %v1559 = vunpack.c.l.b16 %v475
    %v1560 = vunpack.c.l.b16 %v476
    %v1561 = vunpack.c.l.b16 %v477
    %v1562 = vunpack.c.l.b16 %v478
    %v1563 = vunpack.c.l.b16 %v479
    %v1564 = vunpack.c.l.b16 %v480
    %v1565 = vunpack.c.l.b16 %v481
    %v1566 = vunpack.c.l.b16 %v482
    %v1567 = vunpack.c.l.b16 %v483
    %v1568 = vunpack.c.l.b16 %v484
    %v1569 = vunpack.c.l.b16 %v485
    %v1570 = vunpack.c.l.b16 %v486
    %v1571 = vunpack.c.l.b16 %v487
    %v1572 = vunpack.c.l.b16 %v488
    %v1573 = vunpack.c.l.b16 %v489
    %v1574 = vunpack.c.l.b16 %v490
    %v1575 = vunpack.c.l.b16 %v491
    %v1576 = vunpack.c.l.b16 %v492
    %v1577 = vunpack.c.l.b16 %v493
    %v1578 = vunpack.c.l.b16 %v494
    %v1579 = vunpack.c.l.b16 %v495
    %v1580 = vunpack.c.l.b16 %v496
    %v1581 = vunpack.c.l.b16 %v497
    %v1582 = vunpack.c.l.b16 %v498
    %v1583 = vunpack.c.l.b16 %v499
    %v1584 = vunpack.c.l.b16 %v500
    %v1585 = vunpack.c.l.b16 %v501
    %v1586 = vunpack.c.l.b16 %v502
    %v1587 = vunpack.c.l.b16 %v503
    %v1588 = vunpack.c.l.b16 %v504
    %v1589 = vunpack.c.l.b16 %v505
    %v1590 = vunpack.c.l.b16 %v506
    %v1591 = vunpack.c.l.b16 %v507
    %v1592 = vunpack.c.l.b16 %v508
    %v1593 = vunpack.c.l.b16 %v509
    %v1594 = vunpack.c.l.b16 %v510
    %v1595 = vunpack.c.l.b16 %v511
    %v1596 = vunpack.c.l.b16 %v512
    %v1597 = vunpack.c.l.b16 %v513
    %v1598 = vunpack.c.l.b16 %v514
    %v1599 = vunpack.c.l.b16 %v515
    %v1600 = vunpack.c.l.b16 %v516
    %v1601 = vunpack.c.l.b16 %v517
    %v1602 = vunpack.c.l.b16 %v518
    %v1603 = vunpack.c.l.b16 %v519
    %v1604 = vunpack.c.l.b16 %v520
    %v1605 = vunpack.c.l.b16 %v521
    %v1606 = vunpack.c.l.b16 %v522
    %v1607 = vunpack.c.l.b16 %v523
    %v1608 = vunpack.c.l.b16 %v524
    %v1609 = vunpack.c.l.b16 %v525
    %v1610 = vunpack.c.l.b16 %v526
    %v1611 = vunpack.c.l.b16 %v527
    %v1612 = vunpack.c.l.b16 %v528
    %v1613 = vunpack.c.l.b16 %v529
    %v1614 = vunpack.c.l.b16 %v530
    %v1615 = vunpack.c.l.b16 %v531
    %v1616 = vunpack.c.l.b16 %v532
    %v1617 = vunpack.c.l.b16 %v533
    %v1618 = vunpack.c.l.b16 %v534
    %v1619 = vunpack.c.l.b16 %v535
    %v1620 = vunpack.c.l.b16 %v536
    %v1621 = vunpack.c.l.b16 %v537
    %v1622 = vunpack.c.l.b16 %v538
    %v1623 = vunpack.c.l.b16 %v539
    %v1624 = vunpack.c.l.b16 %v540
    %v1625 = vunpack.c.l.b16 %v541
    %v1626 = vunpack.c.l.b16 %v542
    %v1627 = vunpack.c.l.b16 %v543
    %v1628 = vunpack.c.l.b16 %v544
    %v1629 = vunpack.c.l.b16 %v545
    %v1630 = vunpack.c.l.b16 %v546
    %v1631 = vunpack.c.l.b16 %v547
    %v1632 = vunpack.c.l.b16 %v548
    %v1633 = vunpack.c.l.b16 %v549
    %v1634 = vunpack.c.l.b16 %v550
    %v1635 = vunpack.c.l.b16 %v551
    %v1636 = vunpack.c.l.b16 %v552
    %v1637 = vunpack.c.l.b16 %v553
    %v1638 = vunpack.c.l.b16 %v554
    %v1639 = vunpack.c.l.b16 %v555
    %v1640 = vunpack.c.l.b16 %v556
    %v1641 = vunpack.c.l.b16 %v557
    %v1642 = vunpack.c.l.b16 %v558
    %v1643 = vunpack.c.l.b16 %v559
    %v1644 = vunpack.c.l.b16 %v560
    %v1645 = vunpack.c.l.b16 %v561
    %v1646 = vunpack.c.l.b16 %v562
    %v1647 = vunpack.c.l.b16 %v563
    %v1648 = vunpack.c.l.b16 %v564
    %v1649 = vunpack.c.l.b16 %v565
    %v1650 = vunpack.c.l.b16 %v566
    %v1651 = vunpack.c.l.b16 %v567
    %v1652 = vunpack.c.l.b16 %v568
    %v1653 = vunpack.c.l.b16 %v569
    %v1654 = vunpack.c.l.b16 %v570
    %v1655 = vunpack.c.l.b16 %v571
    %v1656 = vunpack.c.l.b16 %v572
    %v1657 = vunpack.c.l.b16 %v573
    %v1658 = vunpack.c.l.b16 %v574
    %v1659 = vunpack.c.l.b16 %v575
    %v1660 = vunpack.c.l.b16 %v576
    %v1661 = vunpack.c.l.b16 %v577
    %v1662 = vunpack.c.l.b16 %v578
    %v1663 = vunpack.c.l.b16 %v579
    %v1664 = vunpack.c.l.b16 %v580
    %v1665 = vunpack.c.l.b16 %v581
    %v1666 = vunpack.c.l.b16 %v582
    %v1667 = vunpack.c.l.b16 %v583
    %v1668 = vunpack.c.l.b16 %v584
    %v1669 = vunpack.c.l.b16 %v585
    %v1670 = vunpack.c.l.b16 %v586
    %v1671 = vunpack.c.l.b16 %v587
    %v1672 = vunpack.c.l.b16 %v588
    %v1673 = vunpack.c.l.b16 %v589
    %v1674 = vunpack.c.l.b16 %v590
    %v1675 = vunpack.c.l.b16 %v591
    %v1676 = vunpack.c.l.b16 %v592
    %v1677 = vunpack.c.l.b16 %v593
    %v1678 = vunpack.c.l.b16 %v594
    %v1679 = vunpack.c.l.b16 %v595
    %v1680 = vunpack.c.l.b16 %v596
    %v1681 = vunpack.c.l.b16 %v597
    %v1682 = vunpack.c.l.b16 %v598
    %v1683 = vunpack.c.l.b16 %v599
    %v1684 = vunpack.c.l.b16 %v600
    %v1685 = vunpack.c.l.b16 %v601
    %v1686 = vunpack.c.l.b16 %v602
    %v1687 = vunpack.c.l.b16 %v603
    %v1688 = vunpack.c.l.b16 %v604
    %v1689 = vunpack.c.l.b16 %v605
    %v1690 = vunpack.c.l.b16 %v606
    %v1691 = vunpack.c.l.b16 %v607
    %v1692 = vunpack.c.l.b16 %v608
    %v1693 = vunpack.c.l.b16 %v609
    %v1694 = vunpack.c.l.b16 %v610
    %v1695 = vunpack.c.l.b16 %v611
    %v1696 = vunpack.c.l.b16 %v612
    %v1697 = vunpack.c.l.b16 %v613
    %v1698 = vunpack.c.l.b16 %v614
    %v1699 = vunpack.c.l.b16 %v615
    %v1700 = vunpack.c.l.b16 %v616
    %v1701 = vunpack.c.l.b16 %v617
    %v1702 = vunpack.c.l.b16 %v618
    %v1703 = vunpack.c.l.b16 %v619
    %v1704 = vunpack.c.l.b16 %v620
    %v1705 = vunpack.c.l.b16 %v621
    %v1706 = vunpack.c.l.b16 %v622
    %v1707 = vunpack.c.l.b16 %v623
    %v1708 = vunpack.c.l.b16 %v624
    %v1709 = vunpack.c.l.b16 %v625
    %v1710 = vunpack.c.l.b16 %v626
    %v1711 = vunpack.c.l.b16 %v627
    %v1712 = vunpack.c.l.b16 %v628
    %v1713 = vunpack.c.l.b16 %v629
    %v1714 = vunpack.c.l.b16 %v630
    %v1715 = vpack.c.b16 %v1176, %v1175
    %v1716 = vpack.c.b16 %v1178, %v1177
    %v1717 = vpack.c.b16 %v1180, %v1179
    %v1718 = vpack.c.b16 %v1182, %v1181
    %v1719 = vpack.c.b16 %v1184, %v1183
    %v1720 = vpack.c.b16 %v1186, %v1185
    %v1721 = vpack.c.b16 %v1188, %v1187
    %v1722 = vpack.c.b16 %v1190, %v1189
    %v1723 = vpack.c.b16 %v1192, %v1191
    %v1724 = vpack.c.b16 %v1194, %v1193
    %v1725 = vpack.c.b16 %v1196, %v1195
    %v1726 = vpack.c.b16 %v1198, %v1197
    %v1727 = vpack.c.b16 %v1200, %v1199
    %v1728 = vpack.c.b16 %v1202, %v1201
    %v1729 = vpack.c.b16 %v1204, %v1203
    %v1730 = vpack.c.b16 %v1206, %v1205
    %v1731 = vpack.c.b16 %v1208, %v1207
    %v1732 = vpack.c.b16 %v1210, %v1209
    %v1733 = vpack.c.b16 %v1212, %v1211
    %v1734 = vpack.c.b16 %v1214, %v1213
    %v1735 = vpack.c.b16 %v1216, %v1215
    %v1736 = vpack.c.b16 %v1218, %v1217
    %v1737 = vpack.c.b16 %v1220, %v1219
    %v1738 = vpack.c.b16 %v1222, %v1221
    %v1739 = vpack.c.b16 %v1224, %v1223
    %v1740 = vpack.c.b16 %v1226, %v1225
    %v1741 = vpack.c.b16 %v1228, %v1227
    %v1742 = vpack.c.b16 %v1230, %v1229
    %v1743 = vpack.c.b16 %v1232, %v1231
    %v1744 = vpack.c.b16 %v1234, %v1233
    %v1745 = vpack.c.b16 %v1236, %v1235
    %v1746 = vpack.c.b16 %v1238, %v1237
    %v1747 = vpack.c.b16 %v1240, %v1239
    %v1748 = vpack.c.b16 %v1242, %v1241
    %v1749 = vpack.c.b16 %v1244, %v1243
    %v1750 = vpack.c.b16 %v1246, %v1245
    %v1751 = vpack.c.b16 %v1248, %v1247
    %v1752 = vpack.c.b16 %v1250, %v1249
    %v1753 = vpack.c.b16 %v1252, %v1251
    %v1754 = vpack.c.b16 %v1254, %v1253
    %v1755 = vpack.c.b16 %v1256, %v1255
    %v1756 = vpack.c.b16 %v1258, %v1257
    %v1757 = vpack.c.b16 %v1260, %v1259
    %v1758 = vpack.c.b16 %v1262, %v1261
    %v1759 = vpack.c.b16 %v1264, %v1263
    %v1760 = vpack.c.b16 %v1266, %v1265
    %v1761 = vpack.c.b16 %v1268, %v1267
    %v1762 = vpack.c.b16 %v1270, %v1269
    %v1763 = vpack.c.b16 %v1272, %v1271
    %v1764 = vpack.c.b16 %v1274, %v1273
    %v1765 = vpack.c.b16 %v1276, %v1275
    %v1766 = vpack.c.b16 %v1278, %v1277
    %v1767 = vpack.c.b16 %v1280, %v1279
    %v1768 = vpack.c.b16 %v1282, %v1281
    %v1769 = vpack.c.b16 %v1284, %v1283
    %v1770 = vpack.c.b16 %v1286, %v1285
    %v1771 = vpack.c.b16 %v1288, %v1287
    %v1772 = vpack.c.b16 %v1290, %v1289
    %v1773 = vpack.c.b16 %v1292, %v1291
    %v1774 = vpack.c.b16 %v1294, %v1293
    %v1775 = vpack.c.b16 %v1296, %v1295
    %v1776 = vpack.c.b16 %v1298, %v1297
    %v1777 = vpack.c.b16 %v1300, %v1299
    %v1778 = vpack.c.b16 %v1302, %v1301
    %v1779 = vpack.c.b16 %v1304, %v1303
    %v1780 = vpack.c.b16 %v1306, %v1305
    %v1781 = vpack.c.b16 %v1308, %v1307
    %v1782 = vpack.c.b16 %v1310, %v1309
    %v1783 = vpack.c.b16 %v1312, %v1311
    %v1784 = vpack.c.b16 %v1314, %v1313
    %v1785 = vpack.c.b16 %v1316, %v1315
    %v1786 = vpack.c.b16 %v1318, %v1317
    %v1787 = vpack.c.b16 %v1320, %v1319
    %v1788 = vpack.c.b16 %v1322, %v1321
    %v1789 = vpack.c.b16 %v1324, %v1323
    %v1790 = vpack.c.b16 %v1326, %v1325
    %v1791 = vpack.c.b16 %v1328, %v1327
    %v1792 = vpack.c.b16 %v1330, %v1329
    %v1793 = vpack.c.b16 %v1332, %v1331
    %v1794 = vpack.c.b16 %v1334, %v1333
    %v1795 = vpack.c.b16 %v1336, %v1335
    %v1796 = vpack.c.b16 %v1338, %v1337
    %v1797 = vpack.c.b16 %v1340, %v1339
    %v1798 = vpack.c.b16 %v1342, %v1341
    %v1799 = vpack.c.b16 %v1344, %v1343
    %v1800 = vpack.c.b16 %v1346, %v1345
    %v1801 = vpack.c.b16 %v1348, %v1347
    %v1802 = vpack.c.b16 %v1350, %v1349
    %v1803 = vpack.c.b16 %v1352, %v1351
    %v1804 = vpack.c.b16 %v1354, %v1353
    %v1805 = vpack.c.b16 %v1356, %v1355
    %v1806 = vpack.c.b16 %v1358, %v1357
    %v1807 = vpack.c.b16 %v1360, %v1359
    %v1808 = vpack.c.b16 %v1362, %v1361
    %v1809 = vpack.c.b16 %v1364, %v1363
    %v1810 = vpack.c.b16 %v1366, %v1365
    %v1811 = vpack.c.b16 %v1368, %v1367
    %v1812 = vpack.c.b16 %v1370, %v1369
    %v1813 = vpack.c.b16 %v1372, %v1371
    %v1814 = vpack.c.b16 %v1374, %v1373
    %v1815 = vpack.c.b16 %v1376, %v1375
    %v1816 = vpack.c.b16 %v1378, %v1377
    %v1817 = vpack.c.b16 %v1380, %v1379
    %v1818 = vpack.c.b16 %v1382, %v1381
    %v1819 = vpack.c.b16 %v1384, %v1383
    %v1820 = vpack.c.b16 %v1386, %v1385
    %v1821 = vpack.c.b16 %v1388, %v1387
    %v1822 = vpack.c.b16 %v1390, %v1389
    %v1823 = vpack.c.b16 %v1392, %v1391
    %v1824 = vpack.c.b16 %v1394, %v1393
    %v1825 = vpack.c.b16 %v1396, %v1395
    %v1826 = vpack.c.b16 %v1398, %v1397
    %v1827 = vpack.c.b16 %v1400, %v1399
    %v1828 = vpack.c.b16 %v1402, %v1401
    %v1829 = vpack.c.b16 %v1404, %v1403
    %v1830 = vpack.c.b16 %v1406, %v1405
    %v1831 = vpack.c.b16 %v1408, %v1407
    %v1832 = vpack.c.b16 %v1410, %v1409
    %v1833 = vpack.c.b16 %v1412, %v1411
    %v1834 = vpack.c.b16 %v1414, %v1413
    %v1835 = vpack.c.b16 %v1416, %v1415
    %v1836 = vpack.c.b16 %v1418, %v1417
    %v1837 = vpack.c.b16 %v1420, %v1419
    %v1838 = vpack.c.b16 %v1422, %v1421
    %v1839 = vpack.c.b16 %v1424, %v1423
    %v1840 = vpack.c.b16 %v1426, %v1425
    %v1841 = vpack.c.b16 %v1428, %v1427
    %v1842 = vpack.c.b16 %v1430, %v1429
    %v1843 = vpack.c.b16 %v1432, %v1431
    %v1844 = vpack.c.b16 %v1434, %v1433
    %v1845 = vpack.c.b16 %v1436, %v1435
    %v1846 = vpack.c.b16 %v1438, %v1437
    %v1847 = vpack.c.b16 %v1440, %v1439
    %v1848 = vpack.c.b16 %v1442, %v1441
    %v1849 = vpack.c.b16 %v1444, %v1443
    %v1850 = vpack.c.b16 %v1446, %v1445
    %v1851 = vpack.c.b16 %v1448, %v1447
    %v1852 = vpack.c.b16 %v1450, %v1449
    %v1853 = vpack.c.b16 %v1452, %v1451
    %v1854 = vpack.c.b16 %v1454, %v1453
    %v1855 = vpack.c.b16 %v1456, %v1455
    %v1856 = vpack.c.b16 %v1458, %v1457
    %v1857 = vpack.c.b16 %v1460, %v1459
    %v1858 = vpack.c.b16 %v1462, %v1461
    %v1859 = vpack.c.b16 %v1464, %v1463
    %v1860 = vpack.c.b16 %v1466, %v1465
    %v1861 = vpack.c.b16 %v1468, %v1467
    %v1862 = vpack.c.b16 %v1470, %v1469
    %v1863 = vpack.c.b16 %v1472, %v1471
    %v1864 = vpack.c.b16 %v1474, %v1473
    %v1865 = vpack.c.b16 %v1476, %v1475
    %v1866 = vpack.c.b16 %v1478, %v1477
    %v1867 = vpack.c.b16 %v1480, %v1479
    %v1868 = vpack.c.b16 %v1482, %v1481
    %v1869 = vpack.c.b16 %v1484, %v1483
    %v1870 = vpack.c.b16 %v1486, %v1485
    %v1871 = vpack.c.b16 %v1488, %v1487
    %v1872 = vpack.c.b16 %v1490, %v1489
    %v1873 = vpack.c.b16 %v1492, %v1491
    %v1874 = vpack.c.b16 %v1494, %v1493
    %v1875 = vpack.c.b16 %v1496, %v1495
    %v1876 = vpack.c.b16 %v1498, %v1497
    %v1877 = vpack.c.b16 %v1500, %v1499
    %v1878 = vpack.c.b16 %v1502, %v1501
    %v1879 = vpack.c.b16 %v1504, %v1503
    %v1880 = vpack.c.b16 %v1506, %v1505
    %v1881 = vpack.c.b16 %v1508, %v1507
    %v1882 = vpack.c.b16 %v1510, %v1509
    %v1883 = vpack.c.b16 %v1512, %v1511
    %v1884 = vpack.c.b16 %v1514, %v1513
    %v1885 = vpack.c.b16 %v1516, %v1515
    %v1886 = vpack.c.b16 %v1518, %v1517
    %v1887 = vpack.c.b16 %v1520, %v1519
    %v1888 = vpack.c.b16 %v1522, %v1521
    %v1889 = vpack.c.b16 %v1524, %v1523
    %v1890 = vpack.c.b16 %v1526, %v1525
    %v1891 = vpack.c.b16 %v1528, %v1527
    %v1892 = vpack.c.b16 %v1530, %v1529
    %v1893 = vpack.c.b16 %v1532, %v1531
    %v1894 = vpack.c.b16 %v1534, %v1533
    %v1895 = vpack.c.b16 %v1536, %v1535
    %v1896 = vpack.c.b16 %v1538, %v1537
    %v1897 = vpack.c.b16 %v1540, %v1539
    %v1898 = vpack.c.b16 %v1542, %v1541
    %v1899 = vpack.c.b16 %v1544, %v1543
    %v1900 = vpack.c.b16 %v1546, %v1545
    %v1901 = vpack.c.b16 %v1548, %v1547
    %v1902 = vpack.c.b16 %v1550, %v1549
    %v1903 = vpack.c.b16 %v1552, %v1551
    %v1904 = vpack.c.b16 %v1554, %v1553
    %v1905 = vpack.c.b16 %v1556, %v1555
    %v1906 = vpack.c.b16 %v1558, %v1557
    %v1907 = vpack.c.b16 %v1560, %v1559
    %v1908 = vpack.c.b16 %v1562, %v1561
    %v1909 = vpack.c.b16 %v1564, %v1563
    %v1910 = vpack.c.b16 %v1566, %v1565
    %v1911 = vpack.c.b16 %v1568, %v1567
    %v1912 = vpack.c.b16 %v1570, %v1569
    %v1913 = vpack.c.b16 %v1572, %v1571
    %v1914 = vpack.c.b16 %v1574, %v1573
    %v1915 = vpack.c.b16 %v1576, %v1575
    %v1916 = vpack.c.b16 %v1578, %v1577
    %v1917 = vpack.c.b16 %v1580, %v1579
    %v1918 = vpack.c.b16 %v1582, %v1581
    %v1919 = vpack.c.b16 %v1584, %v1583
    %v1920 = vpack.c.b16 %v1586, %v1585
    %v1921 = vpack.c.b16 %v1588, %v1587
    %v1922 = vpack.c.b16 %v1590, %v1589
    %v1923 = vpack.c.b16 %v1592, %v1591
    %v1924 = vpack.c.b16 %v1594, %v1593
    %v1925 = vpack.c.b16 %v1596, %v1595
    %v1926 = vpack.c.b16 %v1598, %v1597
    %v1927 = vpack.c.b16 %v1600, %v1599
    %v1928 = vpack.c.b16 %v1602, %v1601
    %v1929 = vpack.c.b16 %v1604, %v1603
    %v1930 = vpack.c.b16 %v1606, %v1605
    %v1931 = vpack.c.b16 %v1608, %v1607
    %v1932 = vpack.c.b16 %v1610, %v1609
    %v1933 = vpack.c.b16 %v1612, %v1611
    %v1934 = vpack.c.b16 %v1614, %v1613
    %v1935 = vpack.c.b16 %v1616, %v1615
    %v1936 = vpack.c.b16 %v1618, %v1617
    %v1937 = vpack.c.b16 %v1620, %v1619
    %v1938 = vpack.c.b16 %v1622, %v1621
    %v1939 = vpack.c.b16 %v1624, %v1623
    %v1940 = vpack.c.b16 %v1626, %v1625
    %v1941 = vpack.c.b16 %v1628, %v1627
    %v1942 = vpack.c.b16 %v1630, %v1629
    %v1943 = vpack.c.b16 %v1632, %v1631
    %v1944 = vpack.c.b16 %v1634, %v1633
    %v1945 = vpack.c.b16 %v1636, %v1635
    %v1946 = vpack.c.b16 %v1638, %v1637
    %v1947 = vpack.c.b16 %v1640, %v1639
    %v1948 = vpack.c.b16 %v1642, %v1641
    %v1949 = vpack.c.b16 %v1644, %v1643
    %v1950 = vpack.c.b16 %v1646, %v1645
    %v1951 = vpack.c.b16 %v1648, %v1647
    %v1952 = vpack.c.b16 %v1650, %v1649
    %v1953 = vpack.c.b16 %v1652, %v1651
    %v1954 = vpack.c.b16 %v1654, %v1653
    %v1955 = vpack.c.b16 %v1656, %v1655
    %v1956 = vpack.c.b16 %v1658, %v1657
    %v1957 = vpack.c.b16 %v1660, %v1659
    %v1958 = vpack.c.b16 %v1662, %v1661
    %v1959 = vpack.c.b16 %v1664, %v1663
    %v1960 = vpack.c.b16 %v1666, %v1665
    %v1961 = vpack.c.b16 %v1668, %v1667
    %v1962 = vpack.c.b16 %v1670, %v1669
    %v1963 = vpack.c.b16 %v1672, %v1671
    %v1964 = vpack.c.b16 %v1674, %v1673
    %v1965 = vpack.c.b16 %v1676, %v1675
    %v1966 = vpack.c.b16 %v1678, %v1677
    %v1967 = vpack.c.b16 %v1680, %v1679
    %v1968 = vpack.c.b16 %v1682, %v1681
    %v1969 = vpack.c.b16 %v1684, %v1683
    %v1970 = vpack.c.b16 %v1686, %v1685
    %v1971 = vpack.c.b16 %v1688, %v1687
    %v1972 = vpack.c.b16 %v1690, %v1689
    %v1973 = vpack.c.b16 %v1692, %v1691
    %v1974 = vpack.c.b16 %v1694, %v1693
    %v1975 = vpack.c.b16 %v1696, %v1695
    %v1976 = vpack.c.b16 %v1698, %v1697
    %v1977 = vpack.c.b16 %v1700, %v1699
    %v1978 = vpack.c.b16 %v1702, %v1701
    %v1979 = vpack.c.b16 %v1704, %v1703
    %v1980 = vpack.c.b16 %v1706, %v1705
    %v1981 = vpack.c.b16 %v1708, %v1707
    %v1982 = vpack.c.b16 %v1710, %v1709
    %v1983 = vpack.c.b16 %v1712, %v1711
    %v1984 = vpack.c.b16 %v1714, %v1713
    %vm2255 = vcmask 785408
    %v2257 = vsel %vm2255, %v89, 0
    %2259 = vmatprep.subr.bf16.mxu0 0
    %2260 = vmatpush1.bf16.msra.mxu0 %v1715
    %2261 = vmatprep.subr.bf16.mxu0 0
    %2262 = vmatpush1.bf16.msra.mxu0 %v1716
    %2263 = vmatprep.subr.bf16.mxu0 0
    %2264 = vmatpush1.bf16.msra.mxu0 %v1717
    %2265 = vmatprep.subr.bf16.mxu0 0
    %2266 = vmatpush1.bf16.msra.mxu0 %v1718
    %2267 = vmatprep.subr.bf16.mxu0 0
    %2268 = vmatpush1.bf16.msra.mxu0 %v1719
    %2269 = vmatprep.subr.bf16.mxu0 0
    %2270 = vmatpush1.bf16.msra.mxu0 %v1720
    %2271 = vmatprep.subr.bf16.mxu0 0
    %2272 = vmatpush1.bf16.msra.mxu0 %v1721
    %2273 = vmatprep.subr.bf16.mxu0 0
    %2274 = vmatpush1.bf16.msra.mxu0 %v1722
    %2275 = vmatprep.subr.bf16.mxu0 0
    %2276 = vmatpush1.bf16.msra.mxu0 %v1723
    %2277 = vmatprep.subr.bf16.mxu0 0
    %2278 = vmatpush1.bf16.msra.mxu0 %v1724
    %2279 = vmatprep.subr.bf16.mxu0 0
    %2280 = vmatpush1.bf16.msra.mxu0 %v1725
    %2281 = vmatprep.subr.bf16.mxu0 0
    %2282 = vmatpush1.bf16.msra.mxu0 %v1726
    %2283 = vmatprep.subr.bf16.mxu0 0
    %2284 = vmatpush1.bf16.msra.mxu0 %v1727
    %2285 = vmatprep.subr.bf16.mxu0 0
    %2286 = vmatpush1.bf16.msra.mxu0 %v1728
    %2287 = vmatprep.subr.bf16.mxu0 0
    %2288 = vmatpush1.bf16.msra.mxu0 %v1729
    %2289 = vmatprep.subr.bf16.mxu0 0
    %2290 = vmatpush1.bf16.msra.mxu0 %v1730
    %2291 = vmatprep.mubr.bf16.mxu0 %v57
    %2292 = vmatmul.mubr.bf16.gmra.mrb[0].mxu0 %v56
    %v2293 = vpop.f32.mrb[0].mxu0
    %v2294 = vadd.f32 %v634, %v2293
    %v2295 = vpop.f32.mrb[0].mxu0
    %v2296 = vpop.f32.mrb[0].mxu0
    %v2297 = vpop.f32.mrb[0].mxu0
    %2298 = vdwg.mxu0
    %2299 = vmatprep.subr.bf16.mxu0 0
    %2300 = vmatpush1.bf16.msra.mxu0 %v1731
    %2301 = vmatprep.subr.bf16.mxu0 0
    %2302 = vmatpush1.bf16.msra.mxu0 %v1732
    %2303 = vmatprep.subr.bf16.mxu0 0
    %2304 = vmatpush1.bf16.msra.mxu0 %v1733
    %2305 = vmatprep.subr.bf16.mxu0 0
    %2306 = vmatpush1.bf16.msra.mxu0 %v1734
    %2307 = vmatprep.subr.bf16.mxu0 0
    %2308 = vmatpush1.bf16.msra.mxu0 %v1735
    %2309 = vmatprep.subr.bf16.mxu0 0
    %2310 = vmatpush1.bf16.msra.mxu0 %v1736
    %2311 = vmatprep.subr.bf16.mxu0 0
    %2312 = vmatpush1.bf16.msra.mxu0 %v1737
    %2313 = vmatprep.subr.bf16.mxu0 0
    %2314 = vmatpush1.bf16.msra.mxu0 %v1738
    %2315 = vmatprep.subr.bf16.mxu0 0
    %2316 = vmatpush1.bf16.msra.mxu0 %v1739
    %2317 = vmatprep.subr.bf16.mxu0 0
    %2318 = vmatpush1.bf16.msra.mxu0 %v1740
    %2319 = vmatprep.subr.bf16.mxu0 0
    %2320 = vmatpush1.bf16.msra.mxu0 %v1741
    %2321 = vmatprep.subr.bf16.mxu0 0
    %2322 = vmatpush1.bf16.msra.mxu0 %v1742
    %2323 = vmatprep.subr.bf16.mxu0 0
    %2324 = vmatpush1.bf16.msra.mxu0 %v1743
    %2325 = vmatprep.subr.bf16.mxu0 0
    %2326 = vmatpush1.bf16.msra.mxu0 %v1744
    %2327 = vmatprep.subr.bf16.mxu0 0
    %2328 = vmatpush1.bf16.msra.mxu0 %v1745
    %2329 = vmatprep.subr.bf16.mxu0 0
    %2330 = vmatpush1.bf16.msra.mxu0 %v1746
    %2331 = vmatprep.mubr.bf16.mxu0 %v59
    %2332 = vmatmul.mubr.bf16.gmra.mrb[0].mxu0 %v58
    %v2333 = vpop.f32.mrb[0].mxu0
    %v2334 = vadd.f32 %v2294, %v2333
    %v2335 = vpop.f32.mrb[0].mxu0
    %v2336 = vpop.f32.mrb[0].mxu0
    %v2337 = vpop.f32.mrb[0].mxu0
    %2338 = vdwg.mxu0
    %2339 = vmatprep.subr.bf16.mxu0 0
    %2340 = vmatpush1.bf16.msra.mxu0 %v1747
    %2341 = vmatprep.subr.bf16.mxu0 0
    %2342 = vmatpush1.bf16.msra.mxu0 %v1748
    %2343 = vmatprep.subr.bf16.mxu0 0
    %2344 = vmatpush1.bf16.msra.mxu0 %v1749
    %2345 = vmatprep.subr.bf16.mxu0 0
    %2346 = vmatpush1.bf16.msra.mxu0 %v1750
    %2347 = vmatprep.subr.bf16.mxu0 0
    %2348 = vmatpush1.bf16.msra.mxu0 %v1751
    %2349 = vmatprep.subr.bf16.mxu0 0
    %2350 = vmatpush1.bf16.msra.mxu0 %v1752
    %2351 = vmatprep.subr.bf16.mxu0 0
    %2352 = vmatpush1.bf16.msra.mxu0 %v1753
    %2353 = vmatprep.subr.bf16.mxu0 0
    %2354 = vmatpush1.bf16.msra.mxu0 %v1754
    %2355 = vmatprep.subr.bf16.mxu0 0
    %2356 = vmatpush1.bf16.msra.mxu0 %v1755
    %2357 = vmatprep.subr.bf16.mxu0 0
    %2358 = vmatpush1.bf16.msra.mxu0 %v1756
    %2359 = vmatprep.subr.bf16.mxu0 0
    %2360 = vmatpush1.bf16.msra.mxu0 %v1757
    %2361 = vmatprep.subr.bf16.mxu0 0
    %2362 = vmatpush1.bf16.msra.mxu0 %v1758
    %2363 = vmatprep.subr.bf16.mxu0 0
    %2364 = vmatpush1.bf16.msra.mxu0 %v1759
    %2365 = vmatprep.subr.bf16.mxu0 0
    %2366 = vmatpush1.bf16.msra.mxu0 %v1760
    %2367 = vmatprep.subr.bf16.mxu0 0
    %2368 = vmatpush1.bf16.msra.mxu0 %v1761
    %2369 = vmatprep.subr.bf16.mxu0 0
    %2370 = vmatpush1.bf16.msra.mxu0 %v1762
    %2371 = vmatprep.mubr.bf16.mxu0 %v61
    %2372 = vmatmul.mubr.bf16.gmra.mrb[0].mxu0 %v60
    %v2373 = vpop.f32.mrb[0].mxu0
    %v2374 = vadd.f32 %v2334, %v2373
    %v2375 = vpop.f32.mrb[0].mxu0
    %v2376 = vpop.f32.mrb[0].mxu0
    %v2377 = vpop.f32.mrb[0].mxu0
    %2378 = vdwg.mxu0
    %2379 = vmatprep.subr.bf16.mxu0 0
    %2380 = vmatpush1.bf16.msra.mxu0 %v1763
    %2381 = vmatprep.subr.bf16.mxu0 0
    %2382 = vmatpush1.bf16.msra.mxu0 %v1764
    %2383 = vmatprep.subr.bf16.mxu0 0
    %2384 = vmatpush1.bf16.msra.mxu0 %v1765
    %2385 = vmatprep.subr.bf16.mxu0 0
    %2386 = vmatpush1.bf16.msra.mxu0 %v1766
    %2387 = vmatprep.subr.bf16.mxu0 0
    %2388 = vmatpush1.bf16.msra.mxu0 %v1767
    %2389 = vmatprep.subr.bf16.mxu0 0
    %2390 = vmatpush1.bf16.msra.mxu0 %v1768
    %2391 = vmatprep.subr.bf16.mxu0 0
    %2392 = vmatpush1.bf16.msra.mxu0 %v1769
    %2393 = vmatprep.subr.bf16.mxu0 0
    %2394 = vmatpush1.bf16.msra.mxu0 %v1770
    %2395 = vmatprep.subr.bf16.mxu0 0
    %2396 = vmatpush1.bf16.msra.mxu0 %v1771
    %2397 = vmatprep.subr.bf16.mxu0 0
    %2398 = vmatpush1.bf16.msra.mxu0 %v1772
    %2399 = vmatprep.subr.bf16.mxu0 0
    %2400 = vmatpush1.bf16.msra.mxu0 %v1773
    %2401 = vmatprep.subr.bf16.mxu0 0
    %2402 = vmatpush1.bf16.msra.mxu0 %v1774
    %2403 = vmatprep.subr.bf16.mxu0 0
    %2404 = vmatpush1.bf16.msra.mxu0 %v1775
    %2405 = vmatprep.subr.bf16.mxu0 0
    %2406 = vmatpush1.bf16.msra.mxu0 %v1776
    %2407 = vmatprep.subr.bf16.mxu0 0
    %2408 = vmatpush1.bf16.msra.mxu0 %v1777
    %2409 = vmatprep.subr.bf16.mxu0 0
    %2410 = vmatpush1.bf16.msra.mxu0 %v1778
    %2411 = vmatprep.mubr.bf16.mxu0 %v63
    %2412 = vmatmul.mubr.bf16.gmra.mrb[0].mxu0 %v62
    %v2413 = vpop.f32.mrb[0].mxu0
    %v2414 = vadd.f32 %v2374, %v2413
    %v2415 = vpop.f32.mrb[0].mxu0
    %v2416 = vpop.f32.mrb[0].mxu0
    %v2417 = vpop.f32.mrb[0].mxu0
    %2418 = vdwg.mxu0
    %2419 = vmatprep.subr.bf16.mxu0 0
    %2420 = vmatpush1.bf16.msra.mxu0 %v1779
    %2421 = vmatprep.subr.bf16.mxu0 0
    %2422 = vmatpush1.bf16.msra.mxu0 %v1780
    %2423 = vmatprep.subr.bf16.mxu0 0
    %2424 = vmatpush1.bf16.msra.mxu0 %v1781
    %2425 = vmatprep.subr.bf16.mxu0 0
    %2426 = vmatpush1.bf16.msra.mxu0 %v1782
    %2427 = vmatprep.subr.bf16.mxu0 0
    %2428 = vmatpush1.bf16.msra.mxu0 %v1783
    %2429 = vmatprep.subr.bf16.mxu0 0
    %2430 = vmatpush1.bf16.msra.mxu0 %v1784
    %2431 = vmatprep.subr.bf16.mxu0 0
    %2432 = vmatpush1.bf16.msra.mxu0 %v1785
    %2433 = vmatprep.subr.bf16.mxu0 0
    %2434 = vmatpush1.bf16.msra.mxu0 %v1786
    %2435 = vmatprep.subr.bf16.mxu0 0
    %2436 = vmatpush1.bf16.msra.mxu0 %v1787
    %2437 = vmatprep.subr.bf16.mxu0 0
    %2438 = vmatpush1.bf16.msra.mxu0 %v1788
    %2439 = vmatprep.subr.bf16.mxu0 0
    %2440 = vmatpush1.bf16.msra.mxu0 %v1789
    %2441 = vmatprep.subr.bf16.mxu0 0
    %2442 = vmatpush1.bf16.msra.mxu0 %v1790
    %2443 = vmatprep.subr.bf16.mxu0 0
    %2444 = vmatpush1.bf16.msra.mxu0 %v1791
    %2445 = vmatprep.subr.bf16.mxu0 0
    %2446 = vmatpush1.bf16.msra.mxu0 %v1792
    %2447 = vmatprep.subr.bf16.mxu0 0
    %2448 = vmatpush1.bf16.msra.mxu0 %v1793
    %2449 = vmatprep.subr.bf16.mxu0 0
    %2450 = vmatpush1.bf16.msra.mxu0 %v1794
    %2451 = vmatprep.mubr.bf16.mxu0 %v65
    %2452 = vmatmul.mubr.bf16.gmra.mrb[0].mxu0 %v64
    %v2453 = vpop.f32.mrb[0].mxu0
    %v2454 = vadd.f32 %v2414, %v2453
    %v2455 = vpop.f32.mrb[0].mxu0
    %v2456 = vpop.f32.mrb[0].mxu0
    %v2457 = vpop.f32.mrb[0].mxu0
    %2458 = vdwg.mxu0
    %2459 = vmatprep.subr.bf16.mxu0 0
    %2460 = vmatpush1.bf16.msra.mxu0 %v1795
    %2461 = vmatprep.subr.bf16.mxu0 0
    %2462 = vmatpush1.bf16.msra.mxu0 %v1796
    %2463 = vmatprep.subr.bf16.mxu0 0
    %2464 = vmatpush1.bf16.msra.mxu0 %v1797
    %2465 = vmatprep.subr.bf16.mxu0 0
    %2466 = vmatpush1.bf16.msra.mxu0 %v1798
    %2467 = vmatprep.subr.bf16.mxu0 0
    %2468 = vmatpush1.bf16.msra.mxu0 %v1799
    %2469 = vmatprep.subr.bf16.mxu0 0
    %2470 = vmatpush1.bf16.msra.mxu0 %v1800
    %2471 = vmatprep.subr.bf16.mxu0 0
    %2472 = vmatpush1.bf16.msra.mxu0 %v1801
    %2473 = vmatprep.subr.bf16.mxu0 0
    %2474 = vmatpush1.bf16.msra.mxu0 %v1802
    %2475 = vmatprep.subr.bf16.mxu0 0
    %2476 = vmatpush1.bf16.msra.mxu0 %v1803
    %2477 = vmatprep.subr.bf16.mxu0 0
    %2478 = vmatpush1.bf16.msra.mxu0 %v1804
    %2479 = vmatprep.subr.bf16.mxu0 0
    %2480 = vmatpush1.bf16.msra.mxu0 %v1805
    %2481 = vmatprep.subr.bf16.mxu0 0
    %2482 = vmatpush1.bf16.msra.mxu0 %v1806
    %2483 = vmatprep.subr.bf16.mxu0 0
    %2484 = vmatpush1.bf16.msra.mxu0 %v1807
    %2485 = vmatprep.subr.bf16.mxu0 0
    %2486 = vmatpush1.bf16.msra.mxu0 %v1808
    %2487 = vmatprep.subr.bf16.mxu0 0
    %2488 = vmatpush1.bf16.msra.mxu0 %v1809
    %2489 = vmatprep.subr.bf16.mxu0 0
    %2490 = vmatpush1.bf16.msra.mxu0 %v1810
    %2491 = vmatprep.mubr.bf16.mxu0 %v67
    %2492 = vmatmul.mubr.bf16.gmra.mrb[0].mxu0 %v66
    %v2493 = vpop.f32.mrb[0].mxu0
    %v2494 = vadd.f32 %v2454, %v2493
    %v2495 = vpop.f32.mrb[0].mxu0
    %v2496 = vpop.f32.mrb[0].mxu0
    %v2497 = vpop.f32.mrb[0].mxu0
    %2498 = vdwg.mxu0
    %2499 = vmatprep.subr.bf16.mxu0 0
    %2500 = vmatpush1.bf16.msra.mxu0 %v1811
    %2501 = vmatprep.subr.bf16.mxu0 0
    %2502 = vmatpush1.bf16.msra.mxu0 %v1812
    %2503 = vmatprep.subr.bf16.mxu0 0
    %2504 = vmatpush1.bf16.msra.mxu0 %v1813
    %2505 = vmatprep.subr.bf16.mxu0 0
    %2506 = vmatpush1.bf16.msra.mxu0 %v1814
    %2507 = vmatprep.subr.bf16.mxu0 0
    %2508 = vmatpush1.bf16.msra.mxu0 %v1815
    %2509 = vmatprep.subr.bf16.mxu0 0
    %2510 = vmatpush1.bf16.msra.mxu0 %v1816
    %2511 = vmatprep.subr.bf16.mxu0 0
    %2512 = vmatpush1.bf16.msra.mxu0 %v1817
    %2513 = vmatprep.subr.bf16.mxu0 0
    %2514 = vmatpush1.bf16.msra.mxu0 %v1818
    %2515 = vmatprep.subr.bf16.mxu0 0
    %2516 = vmatpush1.bf16.msra.mxu0 %v1819
    %2517 = vmatprep.subr.bf16.mxu0 0
    %2518 = vmatpush1.bf16.msra.mxu0 %v1820
    %2519 = vmatprep.subr.bf16.mxu0 0
    %2520 = vmatpush1.bf16.msra.mxu0 %v1821
    %2521 = vmatprep.subr.bf16.mxu0 0
    %2522 = vmatpush1.bf16.msra.mxu0 %v1822
    %2523 = vmatprep.subr.bf16.mxu0 0
    %2524 = vmatpush1.bf16.msra.mxu0 %v1823
    %2525 = vmatprep.subr.bf16.mxu0 0
    %2526 = vmatpush1.bf16.msra.mxu0 %v1824
    %2527 = vmatprep.subr.bf16.mxu0 0
    %2528 = vmatpush1.bf16.msra.mxu0 %v1825
    %2529 = vmatprep.subr.bf16.mxu0 0
    %2530 = vmatpush1.bf16.msra.mxu0 %v1826
    %2531 = vmatprep.mubr.bf16.mxu0 %v69
    %2532 = vmatmul.mubr.bf16.gmra.mrb[0].mxu0 %v68
    %v2533 = vpop.f32.mrb[0].mxu0
    %v2534 = vadd.f32 %v2494, %v2533
    %v2535 = vpop.f32.mrb[0].mxu0
    %v2536 = vpop.f32.mrb[0].mxu0
    %v2537 = vpop.f32.mrb[0].mxu0
    %2538 = vdwg.mxu0
    %2539 = vmatprep.subr.bf16.mxu0 0
    %2540 = vmatpush1.bf16.msra.mxu0 %v1827
    %2541 = vmatprep.subr.bf16.mxu0 0
    %2542 = vmatpush1.bf16.msra.mxu0 %v1828
    %2543 = vmatprep.subr.bf16.mxu0 0
    %2544 = vmatpush1.bf16.msra.mxu0 %v1829
    %2545 = vmatprep.subr.bf16.mxu0 0
    %2546 = vmatpush1.bf16.msra.mxu0 %v1830
    %2547 = vmatprep.subr.bf16.mxu0 0
    %2548 = vmatpush1.bf16.msra.mxu0 %v1831
    %2549 = vmatprep.subr.bf16.mxu0 0
    %2550 = vmatpush1.bf16.msra.mxu0 %v1832
    %2551 = vmatprep.subr.bf16.mxu0 0
    %2552 = vmatpush1.bf16.msra.mxu0 %v1833
    %2553 = vmatprep.subr.bf16.mxu0 0
    %2554 = vmatpush1.bf16.msra.mxu0 %v1834
    %2555 = vmatprep.subr.bf16.mxu0 0
    %2556 = vmatpush1.bf16.msra.mxu0 %v1835
    %2557 = vmatprep.subr.bf16.mxu0 0
    %2558 = vmatpush1.bf16.msra.mxu0 %v1836
    %2559 = vmatprep.subr.bf16.mxu0 0
    %2560 = vmatpush1.bf16.msra.mxu0 %v1837
    %2561 = vmatprep.subr.bf16.mxu0 0
    %2562 = vmatpush1.bf16.msra.mxu0 %v1838
    %2563 = vmatprep.subr.bf16.mxu0 0
    %2564 = vmatpush1.bf16.msra.mxu0 %v1839
    %2565 = vmatprep.subr.bf16.mxu0 0
    %2566 = vmatpush1.bf16.msra.mxu0 %v1840
    %2567 = vmatprep.subr.bf16.mxu0 0
    %2568 = vmatpush1.bf16.msra.mxu0 %v1841
    %2569 = vmatprep.subr.bf16.mxu0 0
    %2570 = vmatpush1.bf16.msra.mxu0 %v1842
    %2571 = vmatprep.mubr.bf16.mxu0 %v71
    %2572 = vmatmul.mubr.bf16.gmra.mrb[0].mxu0 %v70
    %v2573 = vpop.f32.mrb[0].mxu0
    %v2574 = vadd.f32 %v2534, %v2573
    %v2575 = vpop.f32.mrb[0].mxu0
    %v2576 = vpop.f32.mrb[0].mxu0
    %v2577 = vpop.f32.mrb[0].mxu0
    %2578 = vdwg.mxu0
    %2579 = vmatprep.subr.bf16.mxu0 0
    %2580 = vmatpush1.bf16.msra.mxu0 %v1843
    %2581 = vmatprep.subr.bf16.mxu0 0
    %2582 = vmatpush1.bf16.msra.mxu0 %v1844
    %2583 = vmatprep.subr.bf16.mxu0 0
    %2584 = vmatpush1.bf16.msra.mxu0 %v1845
    %2585 = vmatprep.subr.bf16.mxu0 0
    %2586 = vmatpush1.bf16.msra.mxu0 %v1846
    %2587 = vmatprep.subr.bf16.mxu0 0
    %2588 = vmatpush1.bf16.msra.mxu0 %v1847
    %2589 = vmatprep.subr.bf16.mxu0 0
    %2590 = vmatpush1.bf16.msra.mxu0 %v1848
    %2591 = vmatprep.subr.bf16.mxu0 0
    %2592 = vmatpush1.bf16.msra.mxu0 %v1849
    %2593 = vmatprep.subr.bf16.mxu0 0
    %2594 = vmatpush1.bf16.msra.mxu0 %v1850
    %2595 = vmatprep.subr.bf16.mxu0 0
    %2596 = vmatpush1.bf16.msra.mxu0 %v1851
    %2597 = vmatprep.subr.bf16.mxu0 0
    %2598 = vmatpush1.bf16.msra.mxu0 %v1852
    %2599 = vmatprep.subr.bf16.mxu0 0
    %2600 = vmatpush1.bf16.msra.mxu0 %v1853
    %2601 = vmatprep.subr.bf16.mxu0 0
    %2602 = vmatpush1.bf16.msra.mxu0 %v1854
    %2603 = vmatprep.subr.bf16.mxu0 0
    %2604 = vmatpush1.bf16.msra.mxu0 %v1855
    %2605 = vmatprep.subr.bf16.mxu0 0
    %2606 = vmatpush1.bf16.msra.mxu0 %v1856
    %2607 = vmatprep.subr.bf16.mxu0 0
    %2608 = vmatpush1.bf16.msra.mxu0 %v1857
    %2609 = vmatprep.subr.bf16.mxu0 0
    %2610 = vmatpush1.bf16.msra.mxu0 %v1858
    %2611 = vmatprep.mubr.bf16.mxu0 %v73
    %2612 = vmatmul.mubr.bf16.gmra.mrb[0].mxu0 %v72
    %v2613 = vpop.f32.mrb[0].mxu0
    %v2614 = vadd.f32 %v2574, %v2613
    %v2615 = vpop.f32.mrb[0].mxu0
    %v2616 = vpop.f32.mrb[0].mxu0
    %v2617 = vpop.f32.mrb[0].mxu0
    %2618 = vdwg.mxu0
    %2619 = vmatprep.subr.bf16.mxu0 0
    %2620 = vmatpush1.bf16.msra.mxu0 %v1859
    %2621 = vmatprep.subr.bf16.mxu0 0
    %2622 = vmatpush1.bf16.msra.mxu0 %v1860
    %2623 = vmatprep.subr.bf16.mxu0 0
    %2624 = vmatpush1.bf16.msra.mxu0 %v1861
    %2625 = vmatprep.subr.bf16.mxu0 0
    %2626 = vmatpush1.bf16.msra.mxu0 %v1862
    %2627 = vmatprep.subr.bf16.mxu0 0
    %2628 = vmatpush1.bf16.msra.mxu0 %v1863
    %2629 = vmatprep.subr.bf16.mxu0 0
    %2630 = vmatpush1.bf16.msra.mxu0 %v1864
    %2631 = vmatprep.subr.bf16.mxu0 0
    %2632 = vmatpush1.bf16.msra.mxu0 %v1865
    %2633 = vmatprep.subr.bf16.mxu0 0
    %2634 = vmatpush1.bf16.msra.mxu0 %v1866
    %2635 = vmatprep.subr.bf16.mxu0 0
    %2636 = vmatpush1.bf16.msra.mxu0 %v1867
    %2637 = vmatprep.subr.bf16.mxu0 0
    %2638 = vmatpush1.bf16.msra.mxu0 %v1868
    %2639 = vmatprep.subr.bf16.mxu0 0
    %2640 = vmatpush1.bf16.msra.mxu0 %v1869
    %2641 = vmatprep.subr.bf16.mxu0 0
    %2642 = vmatpush1.bf16.msra.mxu0 %v1870
    %2643 = vmatprep.subr.bf16.mxu0 0
    %2644 = vmatpush1.bf16.msra.mxu0 %v1871
    %2645 = vmatprep.subr.bf16.mxu0 0
    %2646 = vmatpush1.bf16.msra.mxu0 %v1872
    %2647 = vmatprep.subr.bf16.mxu0 0
    %2648 = vmatpush1.bf16.msra.mxu0 %v1873
    %2649 = vmatprep.subr.bf16.mxu0 0
    %2650 = vmatpush1.bf16.msra.mxu0 %v1874
    %2651 = vmatprep.mubr.bf16.mxu0 %v75
    %2652 = vmatmul.mubr.bf16.gmra.mrb[0].mxu0 %v74
    %v2653 = vpop.f32.mrb[0].mxu0
    %v2654 = vadd.f32 %v2614, %v2653
    %v2655 = vpop.f32.mrb[0].mxu0
    %v2656 = vpop.f32.mrb[0].mxu0
    %v2657 = vpop.f32.mrb[0].mxu0
    %2658 = vdwg.mxu0
    %2659 = vmatprep.subr.bf16.mxu0 0
    %2660 = vmatpush1.bf16.msra.mxu0 %v1875
    %2661 = vmatprep.subr.bf16.mxu0 0
    %2662 = vmatpush1.bf16.msra.mxu0 %v1876
    %2663 = vmatprep.subr.bf16.mxu0 0
    %2664 = vmatpush1.bf16.msra.mxu0 %v1877
    %2665 = vmatprep.subr.bf16.mxu0 0
    %2666 = vmatpush1.bf16.msra.mxu0 %v1878
    %2667 = vmatprep.subr.bf16.mxu0 0
    %2668 = vmatpush1.bf16.msra.mxu0 %v1879
    %2669 = vmatprep.subr.bf16.mxu0 0
    %2670 = vmatpush1.bf16.msra.mxu0 %v1880
    %2671 = vmatprep.subr.bf16.mxu0 0
    %2672 = vmatpush1.bf16.msra.mxu0 %v1881
    %2673 = vmatprep.subr.bf16.mxu0 0
    %2674 = vmatpush1.bf16.msra.mxu0 %v1882
    %2675 = vmatprep.subr.bf16.mxu0 0
    %2676 = vmatpush1.bf16.msra.mxu0 %v1883
    %2677 = vmatprep.subr.bf16.mxu0 0
    %2678 = vmatpush1.bf16.msra.mxu0 %v1884
    %2679 = vmatprep.subr.bf16.mxu0 0
    %2680 = vmatpush1.bf16.msra.mxu0 %v1885
    %2681 = vmatprep.subr.bf16.mxu0 0
    %2682 = vmatpush1.bf16.msra.mxu0 %v1886
    %2683 = vmatprep.subr.bf16.mxu0 0
    %2684 = vmatpush1.bf16.msra.mxu0 %v1887
    %2685 = vmatprep.subr.bf16.mxu0 0
    %2686 = vmatpush1.bf16.msra.mxu0 %v1888
    %2687 = vmatprep.subr.bf16.mxu0 0
    %2688 = vmatpush1.bf16.msra.mxu0 %v1889
    %2689 = vmatprep.subr.bf16.mxu0 0
    %2690 = vmatpush1.bf16.msra.mxu0 %v1890
    %2691 = vmatprep.mubr.bf16.mxu0 %v77
    %2692 = vmatmul.mubr.bf16.gmra.mrb[0].mxu0 %v76
    %v2693 = vpop.f32.mrb[0].mxu0
    %v2694 = vadd.f32 %v2654, %v2693
    %v2695 = vpop.f32.mrb[0].mxu0
    %v2696 = vpop.f32.mrb[0].mxu0
    %v2697 = vpop.f32.mrb[0].mxu0
    %2698 = vdwg.mxu0
    %2699 = vmatprep.subr.bf16.mxu0 0
    %2700 = vmatpush1.bf16.msra.mxu0 %v1891
    %2701 = vmatprep.subr.bf16.mxu0 0
    %2702 = vmatpush1.bf16.msra.mxu0 %v1892
    %2703 = vmatprep.subr.bf16.mxu0 0
    %2704 = vmatpush1.bf16.msra.mxu0 %v1893
    %2705 = vmatprep.subr.bf16.mxu0 0
    %2706 = vmatpush1.bf16.msra.mxu0 %v1894
    %2707 = vmatprep.subr.bf16.mxu0 0
    %2708 = vmatpush1.bf16.msra.mxu0 %v1895
    %2709 = vmatprep.subr.bf16.mxu0 0
    %2710 = vmatpush1.bf16.msra.mxu0 %v1896
    %2711 = vmatprep.subr.bf16.mxu0 0
    %2712 = vmatpush1.bf16.msra.mxu0 %v1897
    %2713 = vmatprep.subr.bf16.mxu0 0
    %2714 = vmatpush1.bf16.msra.mxu0 %v1898
    %2715 = vmatprep.subr.bf16.mxu0 0
    %2716 = vmatpush1.bf16.msra.mxu0 %v1899
    %2717 = vmatprep.subr.bf16.mxu0 0
    %2718 = vmatpush1.bf16.msra.mxu0 %v1900
    %2719 = vmatprep.subr.bf16.mxu0 0
    %2720 = vmatpush1.bf16.msra.mxu0 %v1901
    %2721 = vmatprep.subr.bf16.mxu0 0
    %2722 = vmatpush1.bf16.msra.mxu0 %v1902
    %2723 = vmatprep.subr.bf16.mxu0 0
    %2724 = vmatpush1.bf16.msra.mxu0 %v1903
    %2725 = vmatprep.subr.bf16.mxu0 0
    %2726 = vmatpush1.bf16.msra.mxu0 %v1904
    %2727 = vmatprep.subr.bf16.mxu0 0
    %2728 = vmatpush1.bf16.msra.mxu0 %v1905
    %2729 = vmatprep.subr.bf16.mxu0 0
    %2730 = vmatpush1.bf16.msra.mxu0 %v1906
    %2731 = vmatprep.mubr.bf16.mxu0 %v79
    %2732 = vmatmul.mubr.bf16.gmra.mrb[0].mxu0 %v78
    %v2733 = vpop.f32.mrb[0].mxu0
    %v2734 = vadd.f32 %v2694, %v2733
    %v2735 = vpop.f32.mrb[0].mxu0
    %v2736 = vpop.f32.mrb[0].mxu0
    %v2737 = vpop.f32.mrb[0].mxu0
    %2738 = vdwg.mxu0
    %2739 = vmatprep.subr.bf16.mxu0 0
    %2740 = vmatpush1.bf16.msra.mxu0 %v1907
    %2741 = vmatprep.subr.bf16.mxu0 0
    %2742 = vmatpush1.bf16.msra.mxu0 %v1908
    %2743 = vmatprep.subr.bf16.mxu0 0
    %2744 = vmatpush1.bf16.msra.mxu0 %v1909
    %2745 = vmatprep.subr.bf16.mxu0 0
    %2746 = vmatpush1.bf16.msra.mxu0 %v1910
    %2747 = vmatprep.subr.bf16.mxu0 0
    %2748 = vmatpush1.bf16.msra.mxu0 %v1911
    %2749 = vmatprep.subr.bf16.mxu0 0
    %2750 = vmatpush1.bf16.msra.mxu0 %v1912
    %2751 = vmatprep.subr.bf16.mxu0 0
    %2752 = vmatpush1.bf16.msra.mxu0 %v1913
    %2753 = vmatprep.subr.bf16.mxu0 0
    %2754 = vmatpush1.bf16.msra.mxu0 %v1914
    %2755 = vmatprep.subr.bf16.mxu0 0
    %2756 = vmatpush1.bf16.msra.mxu0 %v1915
    %2757 = vmatprep.subr.bf16.mxu0 0
    %2758 = vmatpush1.bf16.msra.mxu0 %v1916
    %2759 = vmatprep.subr.bf16.mxu0 0
    %2760 = vmatpush1.bf16.msra.mxu0 %v1917
    %2761 = vmatprep.subr.bf16.mxu0 0
    %2762 = vmatpush1.bf16.msra.mxu0 %v1918
    %2763 = vmatprep.subr.bf16.mxu0 0
    %2764 = vmatpush1.bf16.msra.mxu0 %v1919
    %2765 = vmatprep.subr.bf16.mxu0 0
    %2766 = vmatpush1.bf16.msra.mxu0 %v1920
    %2767 = vmatprep.subr.bf16.mxu0 0
    %2768 = vmatpush1.bf16.msra.mxu0 %v1921
    %2769 = vmatprep.subr.bf16.mxu0 0
    %2770 = vmatpush1.bf16.msra.mxu0 %v1922
    %2771 = vmatprep.mubr.bf16.mxu0 %v81
    %2772 = vmatmul.mubr.bf16.gmra.mrb[0].mxu0 %v80
    %v2773 = vpop.f32.mrb[0].mxu0
    %v2774 = vadd.f32 %v2734, %v2773
    %v2775 = vpop.f32.mrb[0].mxu0
    %v2776 = vpop.f32.mrb[0].mxu0
    %v2777 = vpop.f32.mrb[0].mxu0
    %2778 = vdwg.mxu0
    %2779 = vmatprep.subr.bf16.mxu0 0
    %2780 = vmatpush1.bf16.msra.mxu0 %v1923
    %2781 = vmatprep.subr.bf16.mxu0 0
    %2782 = vmatpush1.bf16.msra.mxu0 %v1924
    %2783 = vmatprep.subr.bf16.mxu0 0
    %2784 = vmatpush1.bf16.msra.mxu0 %v1925
    %2785 = vmatprep.subr.bf16.mxu0 0
    %2786 = vmatpush1.bf16.msra.mxu0 %v1926
    %2787 = vmatprep.subr.bf16.mxu0 0
    %2788 = vmatpush1.bf16.msra.mxu0 %v1927
    %2789 = vmatprep.subr.bf16.mxu0 0
    %2790 = vmatpush1.bf16.msra.mxu0 %v1928
    %2791 = vmatprep.subr.bf16.mxu0 0
    %2792 = vmatpush1.bf16.msra.mxu0 %v1929
    %2793 = vmatprep.subr.bf16.mxu0 0
    %2794 = vmatpush1.bf16.msra.mxu0 %v1930
    %2795 = vmatprep.subr.bf16.mxu0 0
    %2796 = vmatpush1.bf16.msra.mxu0 %v1931
    %2797 = vmatprep.subr.bf16.mxu0 0
    %2798 = vmatpush1.bf16.msra.mxu0 %v1932
    %2799 = vmatprep.subr.bf16.mxu0 0
    %2800 = vmatpush1.bf16.msra.mxu0 %v1933
    %2801 = vmatprep.subr.bf16.mxu0 0
    %2802 = vmatpush1.bf16.msra.mxu0 %v1934
    %2803 = vmatprep.subr.bf16.mxu0 0
    %2804 = vmatpush1.bf16.msra.mxu0 %v1935
    %2805 = vmatprep.subr.bf16.mxu0 0
    %2806 = vmatpush1.bf16.msra.mxu0 %v1936
    %2807 = vmatprep.subr.bf16.mxu0 0
    %2808 = vmatpush1.bf16.msra.mxu0 %v1937
    %2809 = vmatprep.subr.bf16.mxu0 0
    %2810 = vmatpush1.bf16.msra.mxu0 %v1938
    %2811 = vmatprep.mubr.bf16.mxu0 %v83
    %2812 = vmatmul.mubr.bf16.gmra.mrb[0].mxu0 %v82
    %v2813 = vpop.f32.mrb[0].mxu0
    %v2814 = vadd.f32 %v2774, %v2813
    %v2815 = vpop.f32.mrb[0].mxu0
    %v2816 = vpop.f32.mrb[0].mxu0
    %v2817 = vpop.f32.mrb[0].mxu0
    %2818 = vdwg.mxu0
    %2819 = vmatprep.subr.bf16.mxu0 0
    %2820 = vmatpush1.bf16.msra.mxu0 %v1939
    %2821 = vmatprep.subr.bf16.mxu0 0
    %2822 = vmatpush1.bf16.msra.mxu0 %v1940
    %2823 = vmatprep.subr.bf16.mxu0 0
    %2824 = vmatpush1.bf16.msra.mxu0 %v1941
    %2825 = vmatprep.subr.bf16.mxu0 0
    %2826 = vmatpush1.bf16.msra.mxu0 %v1942
    %2827 = vmatprep.subr.bf16.mxu0 0
    %2828 = vmatpush1.bf16.msra.mxu0 %v1943
    %2829 = vmatprep.subr.bf16.mxu0 0
    %2830 = vmatpush1.bf16.msra.mxu0 %v1944
    %2831 = vmatprep.subr.bf16.mxu0 0
    %2832 = vmatpush1.bf16.msra.mxu0 %v1945
    %2833 = vmatprep.subr.bf16.mxu0 0
    %2834 = vmatpush1.bf16.msra.mxu0 %v1946
    %2835 = vmatprep.subr.bf16.mxu0 0
    %2836 = vmatpush1.bf16.msra.mxu0 %v1947
    %2837 = vmatprep.subr.bf16.mxu0 0
    %2838 = vmatpush1.bf16.msra.mxu0 %v1948
    %2839 = vmatprep.subr.bf16.mxu0 0
    %2840 = vmatpush1.bf16.msra.mxu0 %v1949
    %2841 = vmatprep.subr.bf16.mxu0 0
    %2842 = vmatpush1.bf16.msra.mxu0 %v1950
    %2843 = vmatprep.subr.bf16.mxu0 0
    %2844 = vmatpush1.bf16.msra.mxu0 %v1951
    %2845 = vmatprep.subr.bf16.mxu0 0
    %2846 = vmatpush1.bf16.msra.mxu0 %v1952
    %2847 = vmatprep.subr.bf16.mxu0 0
    %2848 = vmatpush1.bf16.msra.mxu0 %v1953
    %2849 = vmatprep.subr.bf16.mxu0 0
    %2850 = vmatpush1.bf16.msra.mxu0 %v1954
    %2851 = vmatprep.mubr.bf16.mxu0 %v85
    %2852 = vmatmul.mubr.bf16.gmra.mrb[0].mxu0 %v84
    %v2853 = vpop.f32.mrb[0].mxu0
    %v2854 = vadd.f32 %v2814, %v2853
    %v2855 = vpop.f32.mrb[0].mxu0
    %v2856 = vpop.f32.mrb[0].mxu0
    %v2857 = vpop.f32.mrb[0].mxu0
    %2858 = vdwg.mxu0
    %2859 = vmatprep.subr.bf16.mxu0 0
    %2860 = vmatpush1.bf16.msra.mxu0 %v1955
    %2861 = vmatprep.subr.bf16.mxu0 0
    %2862 = vmatpush1.bf16.msra.mxu0 %v1956
    %2863 = vmatprep.subr.bf16.mxu0 0
    %2864 = vmatpush1.bf16.msra.mxu0 %v1957
    %2865 = vmatprep.subr.bf16.mxu0 0
    %2866 = vmatpush1.bf16.msra.mxu0 %v1958
    %2867 = vmatprep.subr.bf16.mxu0 0
    %2868 = vmatpush1.bf16.msra.mxu0 %v1959
    %2869 = vmatprep.subr.bf16.mxu0 0
    %2870 = vmatpush1.bf16.msra.mxu0 %v1960
    %2871 = vmatprep.subr.bf16.mxu0 0
    %2872 = vmatpush1.bf16.msra.mxu0 %v1961
    %2873 = vmatprep.subr.bf16.mxu0 0
    %2874 = vmatpush1.bf16.msra.mxu0 %v1962
    %2875 = vmatprep.subr.bf16.mxu0 0
    %2876 = vmatpush1.bf16.msra.mxu0 %v1963
    %2877 = vmatprep.subr.bf16.mxu0 0
    %2878 = vmatpush1.bf16.msra.mxu0 %v1964
    %2879 = vmatprep.subr.bf16.mxu0 0
    %2880 = vmatpush1.bf16.msra.mxu0 %v1965
    %2881 = vmatprep.subr.bf16.mxu0 0
    %2882 = vmatpush1.bf16.msra.mxu0 %v1966
    %2883 = vmatprep.subr.bf16.mxu0 0
    %2884 = vmatpush1.bf16.msra.mxu0 %v1967
    %2885 = vmatprep.subr.bf16.mxu0 0
    %2886 = vmatpush1.bf16.msra.mxu0 %v1968
    %2887 = vmatprep.subr.bf16.mxu0 0
    %2888 = vmatpush1.bf16.msra.mxu0 %v1969
    %2889 = vmatprep.subr.bf16.mxu0 0
    %2890 = vmatpush1.bf16.msra.mxu0 %v1970
    %2891 = vmatprep.mubr.bf16.mxu0 %v87
    %2892 = vmatmul.mubr.bf16.gmra.mrb[0].mxu0 %v86
    %v2893 = vpop.f32.mrb[0].mxu0
    %v2894 = vadd.f32 %v2854, %v2893
    %v2895 = vpop.f32.mrb[0].mxu0
    %v2896 = vpop.f32.mrb[0].mxu0
    %v2897 = vpop.f32.mrb[0].mxu0
    %2898 = vdwg.mxu0
    %2899 = vmatprep.subr.bf16.mxu0 0
    %2900 = vmatpush1.bf16.msra.mxu0 %v1971
    %2901 = vmatprep.subr.bf16.mxu0 0
    %2902 = vmatpush1.bf16.msra.mxu0 %v1972
    %2903 = vmatprep.subr.bf16.mxu0 0
    %2904 = vmatpush1.bf16.msra.mxu0 %v1973
    %2905 = vmatprep.subr.bf16.mxu0 0
    %2906 = vmatpush1.bf16.msra.mxu0 %v1974
    %2907 = vmatprep.subr.bf16.mxu0 0
    %2908 = vmatpush1.bf16.msra.mxu0 %v1975
    %2909 = vmatprep.subr.bf16.mxu0 0
    %2910 = vmatpush1.bf16.msra.mxu0 %v1976
    %2911 = vmatprep.subr.bf16.mxu0 0
    %2912 = vmatpush1.bf16.msra.mxu0 %v1977
    %2913 = vmatprep.subr.bf16.mxu0 0
    %2914 = vmatpush1.bf16.msra.mxu0 %v1978
    %2915 = vmatprep.subr.bf16.mxu0 0
    %2916 = vmatpush1.bf16.msra.mxu0 %v1979
    %2917 = vmatprep.subr.bf16.mxu0 0
    %2918 = vmatpush1.bf16.msra.mxu0 %v1980
    %2919 = vmatprep.subr.bf16.mxu0 0
    %2920 = vmatpush1.bf16.msra.mxu0 %v1981
    %2921 = vmatprep.subr.bf16.mxu0 0
    %2922 = vmatpush1.bf16.msra.mxu0 %v1982
    %2923 = vmatprep.subr.bf16.mxu0 0
    %2924 = vmatpush1.bf16.msra.mxu0 %v1983
    %2925 = vmatprep.subr.bf16.mxu0 0
    %2926 = vmatpush1.bf16.msra.mxu0 %v1984
    %2927 = vmatprep.subr.bf16.mxu0 0
    %2928 = vmatpush1.bf16.msra.mxu0 0
    %2929 = vmatprep.subr.bf16.mxu0 0
    %2930 = vmatpush1.bf16.msra.mxu0 0
    %2931 = vmatprep.mubr.bf16.mxu0 %v2257
    %2932 = vmatmul.mubr.bf16.gmra.mrb[0].mxu0 %v88
    %v2933 = vpop.f32.mrb[0].mxu0
    %v2934 = vadd.f32 %v2894, %v2933
    %v2935 = vpop.f32.mrb[0].mxu0
    %v2936 = vpop.f32.mrb[0].mxu0
    %v2937 = vpop.f32.mrb[0].mxu0
    %2938 = vdwg.mxu0
    %v2939 = vmax.f32 %v2934, 0.0
    %v2940 = vpack.c.bf16 %v2939, %v2939
    %v2941 = vld [vmem:[%s2] sm:$0xf]
    %v2942 = vld [vmem:[%s2 + $0x4] sm:$0xf]
    %v2943 = vld [vmem:[%s2 + $0x8] sm:$0xf]
    %v2944 = vld [vmem:[%s2 + $0xc] sm:$0xf]
    %v2945 = vld [vmem:[%s2 + $0x10] sm:$0xf]
    %v2946 = vld [vmem:[%s2 + $0x14] sm:$0xf]
    %v2947 = vld [vmem:[%s2 + $0x18] sm:$0x1]
    %v2948 = vlaneseq
    %v2949 = vshrl.u32 %v2948, 7
    %v2950 = vsub.s32 1, %v2949
    %v2951 = vrot.slane %v90, %v2950
    %v2959 = vunpack.c.l.b16 %v2941
    %v2960 = vunpack.c.l.b16 %v2942
    %v2961 = vunpack.c.l.b16 %v2943
    %v2962 = vunpack.c.l.b16 %v2944
    %v2963 = vunpack.c.l.b16 %v2945
    %v2964 = vunpack.c.l.b16 %v2946
    %v2965 = vunpack.c.l.b16 %v2947
    %v2966 = vpack.c.b16 %v2960, %v2959
    %v2967 = vpack.c.b16 %v2962, %v2961
    %v2968 = vpack.c.b16 %v2964, %v2963
    %v2969 = vpack.c.b16 %v2965, %v2965
    %vm2973 = vcmask 408576
    %v2975 = vsel %vm2973, %v2940, 0
    %vm2977 = vcmask 1040384
    %v2979 = vsel %vm2977, %v2969, 0
    %2981 = vmatprep.subr.bf16.mxu0 0
    %2982 = vmatpush1.bf16.msra.mxu0 %v2966
    %2983 = vmatprep.subr.bf16.mxu0 0
    %2984 = vmatpush1.bf16.msra.mxu0 %v2967
    %2985 = vmatprep.subr.bf16.mxu0 0
    %2986 = vmatpush1.bf16.msra.mxu0 %v2968
    %2987 = vmatprep.subr.bf16.mxu0 0
    %2988 = vmatpush1.bf16.msra.mxu0 %v2979
    %2989 = vmatprep.subr.bf16.mxu0 0
    %2990 = vmatpush1.bf16.msra.mxu0 0
    %2991 = vmatprep.subr.bf16.mxu0 0
    %2992 = vmatpush1.bf16.msra.mxu0 0
    %2993 = vmatprep.subr.bf16.mxu0 0
    %2994 = vmatpush1.bf16.msra.mxu0 0
    %2995 = vmatprep.subr.bf16.mxu0 0
    %2996 = vmatpush1.bf16.msra.mxu0 0
    %2997 = vmatprep.subr.bf16.mxu0 0
    %2998 = vmatpush1.bf16.msra.mxu0 0
    %2999 = vmatprep.subr.bf16.mxu0 0
    %3000 = vmatpush1.bf16.msra.mxu0 0
    %3001 = vmatprep.subr.bf16.mxu0 0
    %3002 = vmatpush1.bf16.msra.mxu0 0
    %3003 = vmatprep.subr.bf16.mxu0 0
    %3004 = vmatpush1.bf16.msra.mxu0 0
    %3005 = vmatprep.subr.bf16.mxu0 0
    %3006 = vmatpush1.bf16.msra.mxu0 0
    %3007 = vmatprep.subr.bf16.mxu0 0
    %3008 = vmatpush1.bf16.msra.mxu0 0
    %3009 = vmatprep.subr.bf16.mxu0 0
    %3010 = vmatpush1.bf16.msra.mxu0 0
    %3011 = vmatprep.subr.bf16.mxu0 0
    %3012 = vmatpush1.bf16.msra.mxu0 0
    %3013 = vmatprep.mubr.bf16.mxu0 0
    %3014 = vmatmul.mubr.bf16.gmra.mrb[0].mxu0 %v2975
    %v3015 = vpop.f32.mrb[0].mxu0
    %v3016 = vadd.f32 %v2951, %v3015
    %v3017 = vpop.f32.mrb[0].mxu0
    %v3018 = vpop.f32.mrb[0].mxu0
    %v3019 = vpop.f32.mrb[0].mxu0
    %3020 = vdwg.mxu0
    %v3021 = vmax.f32 %v3016, 0.0
    %v3022 = vpack.c.bf16 %v3021, %v3021
    %v3023 = vld [vmem:[%s3] sm:$0xf]
    %v3024 = vld [vmem:[%s3 + $0x4] sm:$0xf]
    %v3025 = vld [vmem:[%s3 + $0x8] sm:$0xf]
    %v3026 = vld [vmem:[%s3 + $0xc] sm:$0x7]
    %v3027 = vlaneseq
    %v3028 = vshrl.u32 %v3027, 7
    %v3029 = vsub.s32 2, %v3028
    %v3030 = vrot.slane %v90, %v3029
    %v3035 = vunpack.c.l.b16 %v3023
    %v3036 = vunpack.c.l.b16 %v3024
    %v3037 = vunpack.c.l.b16 %v3025
    %v3038 = vunpack.c.l.b16 %v3026
    %v3039 = vpack.c.b16 %v3036, %v3035
    %v3040 = vpack.c.b16 %v3038, %v3037
    %vm3042 = vcmask 244736
    %v3044 = vsel %vm3042, %v3022, 0
    %vm3046 = vcmask 1046528
    %v3048 = vsel %vm3046, %v3040, 0
    %3050 = vmatprep.subr.bf16.mxu0 0
    %3051 = vmatpush1.bf16.msra.mxu0 %v3039
    %3052 = vmatprep.subr.bf16.mxu0 0
    %3053 = vmatpush1.bf16.msra.mxu0 %v3048
    %3054 = vmatprep.subr.bf16.mxu0 0
    %3055 = vmatpush1.bf16.msra.mxu0 0
    %3056 = vmatprep.subr.bf16.mxu0 0
    %3057 = vmatpush1.bf16.msra.mxu0 0
    %3058 = vmatprep.subr.bf16.mxu0 0
    %3059 = vmatpush1.bf16.msra.mxu0 0
    %3060 = vmatprep.subr.bf16.mxu0 0
    %3061 = vmatpush1.bf16.msra.mxu0 0
    %3062 = vmatprep.subr.bf16.mxu0 0
    %3063 = vmatpush1.bf16.msra.mxu0 0
    %3064 = vmatprep.subr.bf16.mxu0 0
    %3065 = vmatpush1.bf16.msra.mxu0 0
    %3066 = vmatprep.subr.bf16.mxu0 0
    %3067 = vmatpush1.bf16.msra.mxu0 0
    %3068 = vmatprep.subr.bf16.mxu0 0
    %3069 = vmatpush1.bf16.msra.mxu0 0
    %3070 = vmatprep.subr.bf16.mxu0 0
    %3071 = vmatpush1.bf16.msra.mxu0 0
    %3072 = vmatprep.subr.bf16.mxu0 0
    %3073 = vmatpush1.bf16.msra.mxu0 0
    %3074 = vmatprep.subr.bf16.mxu0 0
    %3075 = vmatpush1.bf16.msra.mxu0 0
    %3076 = vmatprep.subr.bf16.mxu0 0
    %3077 = vmatpush1.bf16.msra.mxu0 0
    %3078 = vmatprep.subr.bf16.mxu0 0
    %3079 = vmatpush1.bf16.msra.mxu0 0
    %3080 = vmatprep.subr.bf16.mxu0 0
    %3081 = vmatpush1.bf16.msra.mxu0 0
    %3082 = vmatprep.mubr.bf16.mxu0 0
    %3083 = vmatmul.mubr.bf16.gmra.mrb[0].mxu0 %v3044
    %v3084 = vpop.f32.mrb[0].mxu0
    %v3085 = vadd.f32 %v3030, %v3084
    %v3086 = vpop.f32.mrb[0].mxu0
    %v3087 = vpop.f32.mrb[0].mxu0
    %v3088 = vpop.f32.mrb[0].mxu0
    %3089 = vdwg.mxu0
    %v3090 = vsub.f32 0.0, %v3085
    %v3091 = vmul.f32 %v3090, 1.442695
    %v3092 = vpow.pop %v3091
    %v3093 = vadd.f32 %v3092, 1.0
    %v3094 = vrcp.pop %v3093
    %v3095 = vmul.f32 1.0, %v3094
    %v3096 = vlaneseq
    %v3097 = vand.u32 %v3096, 127
    %vm3098 = vcmp.lt.s32.totalorder %v3097, 7
    %v3099 = vmul.f32 %v3095, 1.442695
    %v3100 = vpow.pop %v3099
    %v3101 = vsel %vm3098, %v3100, 0.0
    %3102 = vadd.xlane.f32.xlu0 %v3101
    %v3103 = vpop.xlane.xlu0 %3102
    %v3104 = vrcp.pop %v3103
    %v3105 = vmul.f32 %v3101, %v3104
    %3106 = vst [vmem:[#allocation2] sm:$0xff] %v3105
    // Predicated region
    $region22: #{tpu_custom_call.1} parent=1 // pred_check
      _
    $region23: #{tpu_custom_call.1} parent=1 // pred_check_branch
      %3108 = sbr.rel (0) target = $region25
    $region24: #{tpu_custom_call.1} parent=1 // pred_region
      %s3110 = ssub.s32 128, 128
      %3111 = vsyncadd [#allocation3], %s3110
      %s3113 = sshll.u32 [#allocation2], 4
      %s3114 = int_to_ptr.vmem [resolvable:$true] %s3113
      %3116 = dma.vmem_to_hbm [thread:$0]  %s3114, 128, %s5, [#allocation3]
    $region25: #{tpu_custom_call.1} parent=1 // pred_fallthru
      _
    // Predicated region
    $region26: #{tpu_custom_call.1} parent=1 // pred_check
      _
    $region27: #{tpu_custom_call.1} parent=1 // pred_check_branch
      %3118 = sbr.rel (0) target = $region29
    $region28: #{tpu_custom_call.1} parent=1 // pred_region
      %3119 = dma.done [#allocation3], 128
    $region29: #{tpu_custom_call.1} parent=1 // pred_fallthru
      _
    %3120 = vsyncpa [#allocation3], 1

</llo_original>
